<compile_context>
chip_gen: v6e
topology: v6e:2x2x1
jax: 0.10.0
libtpu: 0.0.40
codegen_flags: <defaults>
</compile_context>

<pallas_src>
import math

import jax
import jax.numpy as jnp
import numpy as np
from jax.experimental import pallas as pl
from jax.experimental.pallas import tpu as pltpu

HIDDEN = 32
GATES = 4 * HIDDEN  # 128  (PyTorch gate order: i, f, g, o)


def _lstm_fc_kernel(in0_ref, wa_ref, wih1_ref, b1_ref, fcw_ref, fcb_ref, out_ref):
    """Whole 2-layer LSTM recurrence + final Linear in one kernel (all in VMEM).

    in0_ref : (T, B, 4H)  precomputed x_t * W_ih0^T + (b_ih0 + b_hh0)
    wa_ref  : (2H, 8H)    block weight: [h0|h1] @ W_A -> [h0@Whh0^T | h1@Whh1^T]
    wih1_ref: (H, 4H)     layer-1 input weights (transposed)
    b1_ref  : (1, 4H)     b_ih1 + b_hh1
    fcw_ref : (1, H)      fc weight row
    fcb_ref : (1, 1)      fc bias
    out_ref : (B, 1)
    """
    T, B, _ = in0_ref.shape
    H = HIDDEN

    wa = wa_ref[...]          # (2H, 8H)
    wih1 = wih1_ref[...]      # (H, 4H)
    b1 = b1_ref[...]          # (1, 4H)

    # Hoisted lane mask selecting the g-gate lanes (2H .. 3H) of a 128-wide gates vreg.
    lane = jax.lax.broadcasted_iota(jnp.int32, (B, GATES), 1)
    g_mask = (lane >= 2 * H) & (lane < 3 * H)

    def cell_update(gates, c):
        # Full-vreg activations (2 EUP pushes) + one VPU select, then lane slices.
        s = jax.nn.sigmoid(gates)
        th = jnp.tanh(gates)
        act = jnp.where(g_mask, th, s)          # [sig(i) | sig(f) | tanh(g) | sig(o)]
        i = act[:, 0 * H:1 * H]
        f = act[:, 1 * H:2 * H]
        g = act[:, 2 * H:3 * H]
        o = act[:, 3 * H:4 * H]
        c_new = f * c + i * g
        h_new = o * jnp.tanh(c_new)
        return h_new, c_new

    def step(t, carry):
        hcat, c0, c1 = carry                     # hcat = [h0 | h1]  (B, 2H)
        # Both recurrent terms in one MXU push: (B, 2H) @ (2H, 8H) -> (B, 8H).
        recur = jnp.dot(hcat, wa, preferred_element_type=jnp.float32)
        # Layer 0: input term (with bias) was precomputed outside the loop.
        gates0 = in0_ref[t] + recur[:, :GATES]
        h0, c0 = cell_update(gates0, c0)
        # Layer 1: only the intra-step dependency (h0_new @ W_ih1^T) is a new matmul.
        gates1 = (jnp.dot(h0, wih1, preferred_element_type=jnp.float32)
                  + recur[:, GATES:] + b1)
        h1, c1 = cell_update(gates1, c1)
        hcat = jnp.concatenate([h0, h1], axis=-1)
        return (hcat, c0, c1)

    zeros_h = jnp.zeros((B, 2 * H), jnp.float32)
    zeros_c = jnp.zeros((B, H), jnp.float32)
    hcat, _, _ = jax.lax.fori_loop(0, T, step, (zeros_h, zeros_c, zeros_c),
                                   unroll=True)

    # fc(out[:, -1, :]) on the VPU: multiply + 32-lane reduce (no degenerate MXU push).
    h1 = hcat[:, H:]
    out_ref[...] = (jnp.sum(h1 * fcw_ref[...], axis=-1, keepdims=True)
                    + fcb_ref[...])


def init_params(key):
    """Deterministic init matching PyTorch default U(-1/sqrt(H), 1/sqrt(H)) shapes."""
    k = 1.0 / math.sqrt(HIDDEN)
    keys = jax.random.split(key, 11)

    def u(kk, shape):
        return jax.random.uniform(kk, shape, jnp.float32, minval=-k, maxval=k)

    params = {
        "weight_ih_l0": u(keys[0], (GATES, 1)),
        "weight_hh_l0": u(keys[1], (GATES, HIDDEN)),
        "bias_ih_l0":   u(keys[2], (GATES,)),
        "bias_hh_l0":   u(keys[3], (GATES,)),
        "weight_ih_l1": u(keys[4], (GATES, HIDDEN)),
        "weight_hh_l1": u(keys[5], (GATES, HIDDEN)),
        "bias_ih_l1":   u(keys[6], (GATES,)),
        "bias_hh_l1":   u(keys[7], (GATES,)),
        "fc_weight":    u(keys[8], (1, HIDDEN)),
        "fc_bias":      u(keys[9], (1,)),
    }
    return params


def net_forward(x, params):
    """x: (batch, seq, 1) float32  ->  (batch, 1) float32."""
    B, T, F = x.shape
    assert F == 1
    H = HIDDEN
    x2d = x[..., 0].astype(jnp.float32)                       # (B, T)

    # Pad batch to a sublane multiple (8 rows for f32) so every (B, .) tile is clean.
    B_pad = ((B + 7) // 8) * 8
    if B_pad != B:
        x2d = jnp.pad(x2d, ((0, B_pad - B), (0, 0)))

    wih0_t = params["weight_ih_l0"].T                          # (1, 4H)
    whh0_t = params["weight_hh_l0"].T                          # (H, 4H)
    b0 = (params["bias_ih_l0"] + params["bias_hh_l0"]).reshape(1, GATES)
    wih1_t = params["weight_ih_l1"].T                          # (H, 4H)
    whh1_t = params["weight_hh_l1"].T                          # (H, 4H)
    b1 = (params["bias_ih_l1"] + params["bias_hh_l1"]).reshape(1, GATES)
    fcw_row = params["fc_weight"].reshape(1, H)                # (1, H)
    fcb = params["fc_bias"].reshape(1, 1)                      # (1, 1)

    # Hoist the layer-0 input contribution (and its bias) out of the recurrence:
    # in0_all[t] = x[:, t, None] * W_ih0^T + (b_ih0 + b_hh0)   -> (T, B_pad, 4H)
    in0_all = x2d.T[:, :, None] * wih0_t[None, :, :] + b0[None, :, :]

    # Fused recurrent block weight:  [h0 | h1] @ W_A
    #   lanes    0:4H  <- h0 @ W_hh0^T   (layer-0 recurrent term)
    #   lanes 4H:8H    <- h1 @ W_hh1^T   (layer-1 recurrent term)
    wa = jnp.zeros((2 * H, 2 * GATES), jnp.float32)
    wa = wa.at[:H, :GATES].set(whh0_t)
    wa = wa.at[H:, GATES:].set(whh1_t)

    vmem = pl.BlockSpec(memory_space=pltpu.MemorySpace.VMEM)
    out = pl.pallas_call(
        _lstm_fc_kernel,
        out_shape=jax.ShapeDtypeStruct((B_pad, 1), jnp.float32),
        in_specs=[vmem] * 6,
        out_specs=vmem,
    )(in0_all, wa, wih1_t, b1, fcw_row, fcb)
    return out[:B, :]


def net_forward_reference(x, params):
    """Pure-JAX reference mirroring torch.nn.LSTM semantics, for validation."""
    B, T, _ = x.shape
    H = HIDDEN

    def cell(x_t, h, c, w_ih, w_hh, b_ih, b_hh):
        gates = x_t @ w_ih.T + h @ w_hh.T + b_ih + b_hh
        i = jax.nn.sigmoid(gates[:, 0 * H:1 * H])
        f = jax.nn.sigmoid(gates[:, 1 * H:2 * H])
        g = jnp.tanh(gates[:, 2 * H:3 * H])
        o = jax.nn.sigmoid(gates[:, 3 * H:4 * H])
        c = f * c + i * g
        h = o * jnp.tanh(c)
        return h, c

    h0 = c0 = h1 = c1 = jnp.zeros((B, H), jnp.float32)
    for t in range(T):
        x_t = x[:, t, :]
        h0, c0 = cell(x_t, h0, c0, params["weight_ih_l0"], params["weight_hh_l0"],
                      params["bias_ih_l0"], params["bias_hh_l0"])
        h1, c1 = cell(h0, h1, c1, params["weight_ih_l1"], params["weight_hh_l1"],
                      params["bias_ih_l1"], params["bias_hh_l1"])
    return h1 @ params["fc_weight"].T + params["fc_bias"]


if __name__ == "__main__":
    key = jax.random.PRNGKey(0)
    pkey, xkey = jax.random.split(key)
    params = init_params(pkey)

    batch, seq = 2, 8
    x = jax.random.normal(xkey, (batch, seq, 1), jnp.float32)

    out = net_forward(x, params)
    out = jax.block_until_ready(out)

    ref = net_forward_reference(x, params)
    np.testing.assert_allclose(np.asarray(out), np.asarray(ref), rtol=1e-5, atol=1e-5)

    assert out.shape == (batch, 1)
    print("KERNEL_OK")
</pallas_src>

<mosaic_0001>
module attributes {stable_mosaic.version = 11 : i64} {
  func.func @_lstm_fc_kernel(%arg0: memref<8x8x128xf32, #tpu.memory_space<vmem>>, %arg1: memref<64x256xf32, #tpu.memory_space<vmem>>, %arg2: memref<32x128xf32, #tpu.memory_space<vmem>>, %arg3: memref<1x128xf32, #tpu.memory_space<vmem>>, %arg4: memref<1x32xf32, #tpu.memory_space<vmem>>, %arg5: memref<1x1xf32, #tpu.memory_space<vmem>>, %arg6: memref<8x1xf32, #tpu.memory_space<vmem>>) attributes {dimension_semantics = [], scalar_prefetch = 0 : i64, scratch_operands = 0 : i64, tpu.core_type = #tpu.core_type<tc>} {
    %c0 = arith.constant 0 : index
    %c0_0 = arith.constant 0 : index
    %0 = vector.load %arg1[%c0, %c0_0] : memref<64x256xf32, #tpu.memory_space<vmem>>, vector<64x256xf32>
    %c0_1 = arith.constant 0 : index
    %c0_2 = arith.constant 0 : index
    %1 = vector.load %arg2[%c0_1, %c0_2] : memref<32x128xf32, #tpu.memory_space<vmem>>, vector<32x128xf32>
    %c0_3 = arith.constant 0 : index
    %c0_4 = arith.constant 0 : index
    %2 = vector.load %arg3[%c0_3, %c0_4] : memref<1x128xf32, #tpu.memory_space<vmem>>, vector<1x128xf32>
    %3 = tpu.iota {dimensions = array<i32: 1>} : vector<8x128xi32>
    %c64_i32 = arith.constant 64 : i32
    %4 = vector.broadcast %c64_i32 : i32 to vector<8x128xi32>
    %5 = arith.cmpi sge, %3, %4 : vector<8x128xi32>
    %c96_i32 = arith.constant 96 : i32
    %6 = vector.broadcast %c96_i32 : i32 to vector<8x128xi32>
    %7 = arith.cmpi slt, %3, %6 : vector<8x128xi32>
    %8 = arith.andi %5, %7 : vector<8x128xi1>
    %cst = arith.constant 0.000000e+00 : f32
    %9 = vector.broadcast %cst : f32 to vector<8x64xf32>
    %cst_5 = arith.constant 0.000000e+00 : f32
    %10 = vector.broadcast %cst_5 : f32 to vector<8x32xf32>
    %c0_i32 = arith.constant 0 : i32
    %cst_6 = arith.constant dense<0.000000e+00> : vector<8x256xf32>
    %11 = tpu.matmul %9, %0, %cst_6 {dimension_numbers = #tpu.dot_dimension_numbers<[1], [0], [0], [1], [0, 0, 1, 1], [], []>} : vector<8x64xf32>, vector<64x256xf32>, vector<8x256xf32> -> vector<8x256xf32>
    %12 = arith.index_cast %c0_i32 : i32 to index
    %c0_7 = arith.constant 0 : index
    %c0_8 = arith.constant 0 : index
    %13 = vector.load %arg0[%12, %c0_7, %c0_8] : memref<8x8x128xf32, #tpu.memory_space<vmem>>, vector<1x8x128xf32>
    %14 = vector.shape_cast %13 : vector<1x8x128xf32> to vector<8x128xf32>
    %15 = vector.extract_strided_slice %11 {offsets = [0, 0], sizes = [8, 128], strides = [1, 1]} : vector<8x256xf32> to vector<8x128xf32>
    %16 = arith.addf %14, %15 : vector<8x128xf32>
    %17 = arith.negf %16 : vector<8x128xf32>
    %18 = math.exp %17 : vector<8x128xf32>
    %cst_9 = arith.constant 1.000000e+00 : f32
    %19 = vector.broadcast %cst_9 : f32 to vector<8x128xf32>
    %20 = arith.addf %19, %18 : vector<8x128xf32>
    %21 = arith.divf %19, %20 : vector<8x128xf32>
    %22 = math.tanh %16 : vector<8x128xf32>
    %23 = arith.select %8, %22, %21 : vector<8x128xi1>, vector<8x128xf32>
    %24 = vector.extract_strided_slice %23 {offsets = [0, 0], sizes = [8, 32], strides = [1, 1]} : vector<8x128xf32> to vector<8x32xf32>
    %25 = vector.extract_strided_slice %23 {offsets = [0, 32], sizes = [8, 32], strides = [1, 1]} : vector<8x128xf32> to vector<8x32xf32>
    %26 = vector.extract_strided_slice %23 {offsets = [0, 64], sizes = [8, 32], strides = [1, 1]} : vector<8x128xf32> to vector<8x32xf32>
    %27 = vector.extract_strided_slice %23 {offsets = [0, 96], sizes = [8, 32], strides = [1, 1]} : vector<8x128xf32> to vector<8x32xf32>
    %28 = arith.mulf %25, %10 : vector<8x32xf32>
    %29 = arith.mulf %24, %26 : vector<8x32xf32>
    %30 = arith.addf %28, %29 : vector<8x32xf32>
    %31 = math.tanh %30 : vector<8x32xf32>
    %32 = arith.mulf %27, %31 : vector<8x32xf32>
    %cst_10 = arith.constant dense<0.000000e+00> : vector<8x128xf32>
    %33 = tpu.matmul %32, %1, %cst_10 {dimension_numbers = #tpu.dot_dimension_numbers<[1], [0], [0], [1], [0, 0, 1, 1], [], []>} : vector<8x32xf32>, vector<32x128xf32>, vector<8x128xf32> -> vector<8x128xf32>
    %34 = vector.extract_strided_slice %11 {offsets = [0, 128], sizes = [8, 128], strides = [1, 1]} : vector<8x256xf32> to vector<8x128xf32>
    %35 = arith.addf %33, %34 : vector<8x128xf32>
    %36 = vector.broadcast %2 : vector<1x128xf32> to vector<8x128xf32>
    %37 = arith.addf %35, %36 : vector<8x128xf32>
    %38 = arith.negf %37 : vector<8x128xf32>
    %39 = math.exp %38 : vector<8x128xf32>
    %cst_11 = arith.constant 1.000000e+00 : f32
    %40 = vector.broadcast %cst_11 : f32 to vector<8x128xf32>
    %41 = arith.addf %40, %39 : vector<8x128xf32>
    %42 = arith.divf %40, %41 : vector<8x128xf32>
    %43 = math.tanh %37 : vector<8x128xf32>
    %44 = arith.select %8, %43, %42 : vector<8x128xi1>, vector<8x128xf32>
    %45 = vector.extract_strided_slice %44 {offsets = [0, 0], sizes = [8, 32], strides = [1, 1]} : vector<8x128xf32> to vector<8x32xf32>
    %46 = vector.extract_strided_slice %44 {offsets = [0, 32], sizes = [8, 32], strides = [1, 1]} : vector<8x128xf32> to vector<8x32xf32>
    %47 = vector.extract_strided_slice %44 {offsets = [0, 64], sizes = [8, 32], strides = [1, 1]} : vector<8x128xf32> to vector<8x32xf32>
    %48 = vector.extract_strided_slice %44 {offsets = [0, 96], sizes = [8, 32], strides = [1, 1]} : vector<8x128xf32> to vector<8x32xf32>
    %49 = arith.mulf %46, %10 : vector<8x32xf32>
    %50 = arith.mulf %45, %47 : vector<8x32xf32>
    %51 = arith.addf %49, %50 : vector<8x32xf32>
    %52 = math.tanh %51 : vector<8x32xf32>
    %53 = arith.mulf %48, %52 : vector<8x32xf32>
    %54 = tpu.concatenate %32, %53 in 1 : vector<8x32xf32>, vector<8x32xf32> -> vector<8x64xf32>
    %c1_i32 = arith.constant 1 : i32
    %cst_12 = arith.constant dense<0.000000e+00> : vector<8x256xf32>
    %55 = tpu.matmul %54, %0, %cst_12 {dimension_numbers = #tpu.dot_dimension_numbers<[1], [0], [0], [1], [0, 0, 1, 1], [], []>} : vector<8x64xf32>, vector<64x256xf32>, vector<8x256xf32> -> vector<8x256xf32>
    %56 = arith.index_cast %c1_i32 : i32 to index
    %c0_13 = arith.constant 0 : index
    %c0_14 = arith.constant 0 : index
    %57 = vector.load %arg0[%56, %c0_13, %c0_14] : memref<8x8x128xf32, #tpu.memory_space<vmem>>, vector<1x8x128xf32>
    %58 = vector.shape_cast %57 : vector<1x8x128xf32> to vector<8x128xf32>
    %59 = vector.extract_strided_slice %55 {offsets = [0, 0], sizes = [8, 128], strides = [1, 1]} : vector<8x256xf32> to vector<8x128xf32>
    %60 = arith.addf %58, %59 : vector<8x128xf32>
    %61 = arith.negf %60 : vector<8x128xf32>
    %62 = math.exp %61 : vector<8x128xf32>
    %cst_15 = arith.constant 1.000000e+00 : f32
    %63 = vector.broadcast %cst_15 : f32 to vector<8x128xf32>
    %64 = arith.addf %63, %62 : vector<8x128xf32>
    %65 = arith.divf %63, %64 : vector<8x128xf32>
    %66 = math.tanh %60 : vector<8x128xf32>
    %67 = arith.select %8, %66, %65 : vector<8x128xi1>, vector<8x128xf32>
    %68 = vector.extract_strided_slice %67 {offsets = [0, 0], sizes = [8, 32], strides = [1, 1]} : vector<8x128xf32> to vector<8x32xf32>
    %69 = vector.extract_strided_slice %67 {offsets = [0, 32], sizes = [8, 32], strides = [1, 1]} : vector<8x128xf32> to vector<8x32xf32>
    %70 = vector.extract_strided_slice %67 {offsets = [0, 64], sizes = [8, 32], strides = [1, 1]} : vector<8x128xf32> to vector<8x32xf32>
    %71 = vector.extract_strided_slice %67 {offsets = [0, 96], sizes = [8, 32], strides = [1, 1]} : vector<8x128xf32> to vector<8x32xf32>
    %72 = arith.mulf %69, %30 : vector<8x32xf32>
    %73 = arith.mulf %68, %70 : vector<8x32xf32>
    %74 = arith.addf %72, %73 : vector<8x32xf32>
    %75 = math.tanh %74 : vector<8x32xf32>
    %76 = arith.mulf %71, %75 : vector<8x32xf32>
    %cst_16 = arith.constant dense<0.000000e+00> : vector<8x128xf32>
    %77 = tpu.matmul %76, %1, %cst_16 {dimension_numbers = #tpu.dot_dimension_numbers<[1], [0], [0], [1], [0, 0, 1, 1], [], []>} : vector<8x32xf32>, vector<32x128xf32>, vector<8x128xf32> -> vector<8x128xf32>
    %78 = vector.extract_strided_slice %55 {offsets = [0, 128], sizes = [8, 128], strides = [1, 1]} : vector<8x256xf32> to vector<8x128xf32>
    %79 = arith.addf %77, %78 : vector<8x128xf32>
    %80 = vector.broadcast %2 : vector<1x128xf32> to vector<8x128xf32>
    %81 = arith.addf %79, %80 : vector<8x128xf32>
    %82 = arith.negf %81 : vector<8x128xf32>
    %83 = math.exp %82 : vector<8x128xf32>
    %cst_17 = arith.constant 1.000000e+00 : f32
    %84 = vector.broadcast %cst_17 : f32 to vector<8x128xf32>
    %85 = arith.addf %84, %83 : vector<8x128xf32>
    %86 = arith.divf %84, %85 : vector<8x128xf32>
    %87 = math.tanh %81 : vector<8x128xf32>
    %88 = arith.select %8, %87, %86 : vector<8x128xi1>, vector<8x128xf32>
    %89 = vector.extract_strided_slice %88 {offsets = [0, 0], sizes = [8, 32], strides = [1, 1]} : vector<8x128xf32> to vector<8x32xf32>
    %90 = vector.extract_strided_slice %88 {offsets = [0, 32], sizes = [8, 32], strides = [1, 1]} : vector<8x128xf32> to vector<8x32xf32>
    %91 = vector.extract_strided_slice %88 {offsets = [0, 64], sizes = [8, 32], strides = [1, 1]} : vector<8x128xf32> to vector<8x32xf32>
    %92 = vector.extract_strided_slice %88 {offsets = [0, 96], sizes = [8, 32], strides = [1, 1]} : vector<8x128xf32> to vector<8x32xf32>
    %93 = arith.mulf %90, %51 : vector<8x32xf32>
    %94 = arith.mulf %89, %91 : vector<8x32xf32>
    %95 = arith.addf %93, %94 : vector<8x32xf32>
    %96 = math.tanh %95 : vector<8x32xf32>
    %97 = arith.mulf %92, %96 : vector<8x32xf32>
    %98 = tpu.concatenate %76, %97 in 1 : vector<8x32xf32>, vector<8x32xf32> -> vector<8x64xf32>
    %c2_i32 = arith.constant 2 : i32
    %cst_18 = arith.constant dense<0.000000e+00> : vector<8x256xf32>
    %99 = tpu.matmul %98, %0, %cst_18 {dimension_numbers = #tpu.dot_dimension_numbers<[1], [0], [0], [1], [0, 0, 1, 1], [], []>} : vector<8x64xf32>, vector<64x256xf32>, vector<8x256xf32> -> vector<8x256xf32>
    %100 = arith.index_cast %c2_i32 : i32 to index
    %c0_19 = arith.constant 0 : index
    %c0_20 = arith.constant 0 : index
    %101 = vector.load %arg0[%100, %c0_19, %c0_20] : memref<8x8x128xf32, #tpu.memory_space<vmem>>, vector<1x8x128xf32>
    %102 = vector.shape_cast %101 : vector<1x8x128xf32> to vector<8x128xf32>
    %103 = vector.extract_strided_slice %99 {offsets = [0, 0], sizes = [8, 128], strides = [1, 1]} : vector<8x256xf32> to vector<8x128xf32>
    %104 = arith.addf %102, %103 : vector<8x128xf32>
    %105 = arith.negf %104 : vector<8x128xf32>
    %106 = math.exp %105 : vector<8x128xf32>
    %cst_21 = arith.constant 1.000000e+00 : f32
    %107 = vector.broadcast %cst_21 : f32 to vector<8x128xf32>
    %108 = arith.addf %107, %106 : vector<8x128xf32>
    %109 = arith.divf %107, %108 : vector<8x128xf32>
    %110 = math.tanh %104 : vector<8x128xf32>
    %111 = arith.select %8, %110, %109 : vector<8x128xi1>, vector<8x128xf32>
    %112 = vector.extract_strided_slice %111 {offsets = [0, 0], sizes = [8, 32], strides = [1, 1]} : vector<8x128xf32> to vector<8x32xf32>
    %113 = vector.extract_strided_slice %111 {offsets = [0, 32], sizes = [8, 32], strides = [1, 1]} : vector<8x128xf32> to vector<8x32xf32>
    %114 = vector.extract_strided_slice %111 {offsets = [0, 64], sizes = [8, 32], strides = [1, 1]} : vector<8x128xf32> to vector<8x32xf32>
    %115 = vector.extract_strided_slice %111 {offsets = [0, 96], sizes = [8, 32], strides = [1, 1]} : vector<8x128xf32> to vector<8x32xf32>
    %116 = arith.mulf %113, %74 : vector<8x32xf32>
    %117 = arith.mulf %112, %114 : vector<8x32xf32>
    %118 = arith.addf %116, %117 : vector<8x32xf32>
    %119 = math.tanh %118 : vector<8x32xf32>
    %120 = arith.mulf %115, %119 : vector<8x32xf32>
    %cst_22 = arith.constant dense<0.000000e+00> : vector<8x128xf32>
    %121 = tpu.matmul %120, %1, %cst_22 {dimension_numbers = #tpu.dot_dimension_numbers<[1], [0], [0], [1], [0, 0, 1, 1], [], []>} : vector<8x32xf32>, vector<32x128xf32>, vector<8x128xf32> -> vector<8x128xf32>
    %122 = vector.extract_strided_slice %99 {offsets = [0, 128], sizes = [8, 128], strides = [1, 1]} : vector<8x256xf32> to vector<8x128xf32>
    %123 = arith.addf %121, %122 : vector<8x128xf32>
    %124 = vector.broadcast %2 : vector<1x128xf32> to vector<8x128xf32>
    %125 = arith.addf %123, %124 : vector<8x128xf32>
    %126 = arith.negf %125 : vector<8x128xf32>
    %127 = math.exp %126 : vector<8x128xf32>
    %cst_23 = arith.constant 1.000000e+00 : f32
    %128 = vector.broadcast %cst_23 : f32 to vector<8x128xf32>
    %129 = arith.addf %128, %127 : vector<8x128xf32>
    %130 = arith.divf %128, %129 : vector<8x128xf32>
    %131 = math.tanh %125 : vector<8x128xf32>
    %132 = arith.select %8, %131, %130 : vector<8x128xi1>, vector<8x128xf32>
    %133 = vector.extract_strided_slice %132 {offsets = [0, 0], sizes = [8, 32], strides = [1, 1]} : vector<8x128xf32> to vector<8x32xf32>
    %134 = vector.extract_strided_slice %132 {offsets = [0, 32], sizes = [8, 32], strides = [1, 1]} : vector<8x128xf32> to vector<8x32xf32>
    %135 = vector.extract_strided_slice %132 {offsets = [0, 64], sizes = [8, 32], strides = [1, 1]} : vector<8x128xf32> to vector<8x32xf32>
    %136 = vector.extract_strided_slice %132 {offsets = [0, 96], sizes = [8, 32], strides = [1, 1]} : vector<8x128xf32> to vector<8x32xf32>
    %137 = arith.mulf %134, %95 : vector<8x32xf32>
    %138 = arith.mulf %133, %135 : vector<8x32xf32>
    %139 = arith.addf %137, %138 : vector<8x32xf32>
    %140 = math.tanh %139 : vector<8x32xf32>
    %141 = arith.mulf %136, %140 : vector<8x32xf32>
    %142 = tpu.concatenate %120, %141 in 1 : vector<8x32xf32>, vector<8x32xf32> -> vector<8x64xf32>
    %c3_i32 = arith.constant 3 : i32
    %cst_24 = arith.constant dense<0.000000e+00> : vector<8x256xf32>
    %143 = tpu.matmul %142, %0, %cst_24 {dimension_numbers = #tpu.dot_dimension_numbers<[1], [0], [0], [1], [0, 0, 1, 1], [], []>} : vector<8x64xf32>, vector<64x256xf32>, vector<8x256xf32> -> vector<8x256xf32>
    %144 = arith.index_cast %c3_i32 : i32 to index
    %c0_25 = arith.constant 0 : index
    %c0_26 = arith.constant 0 : index
    %145 = vector.load %arg0[%144, %c0_25, %c0_26] : memref<8x8x128xf32, #tpu.memory_space<vmem>>, vector<1x8x128xf32>
    %146 = vector.shape_cast %145 : vector<1x8x128xf32> to vector<8x128xf32>
    %147 = vector.extract_strided_slice %143 {offsets = [0, 0], sizes = [8, 128], strides = [1, 1]} : vector<8x256xf32> to vector<8x128xf32>
    %148 = arith.addf %146, %147 : vector<8x128xf32>
    %149 = arith.negf %148 : vector<8x128xf32>
    %150 = math.exp %149 : vector<8x128xf32>
    %cst_27 = arith.constant 1.000000e+00 : f32
    %151 = vector.broadcast %cst_27 : f32 to vector<8x128xf32>
    %152 = arith.addf %151, %150 : vector<8x128xf32>
    %153 = arith.divf %151, %152 : vector<8x128xf32>
    %154 = math.tanh %148 : vector<8x128xf32>
    %155 = arith.select %8, %154, %153 : vector<8x128xi1>, vector<8x128xf32>
    %156 = vector.extract_strided_slice %155 {offsets = [0, 0], sizes = [8, 32], strides = [1, 1]} : vector<8x128xf32> to vector<8x32xf32>
    %157 = vector.extract_strided_slice %155 {offsets = [0, 32], sizes = [8, 32], strides = [1, 1]} : vector<8x128xf32> to vector<8x32xf32>
    %158 = vector.extract_strided_slice %155 {offsets = [0, 64], sizes = [8, 32], strides = [1, 1]} : vector<8x128xf32> to vector<8x32xf32>
    %159 = vector.extract_strided_slice %155 {offsets = [0, 96], sizes = [8, 32], strides = [1, 1]} : vector<8x128xf32> to vector<8x32xf32>
    %160 = arith.mulf %157, %118 : vector<8x32xf32>
    %161 = arith.mulf %156, %158 : vector<8x32xf32>
    %162 = arith.addf %160, %161 : vector<8x32xf32>
    %163 = math.tanh %162 : vector<8x32xf32>
    %164 = arith.mulf %159, %163 : vector<8x32xf32>
    %cst_28 = arith.constant dense<0.000000e+00> : vector<8x128xf32>
    %165 = tpu.matmul %164, %1, %cst_28 {dimension_numbers = #tpu.dot_dimension_numbers<[1], [0], [0], [1], [0, 0, 1, 1], [], []>} : vector<8x32xf32>, vector<32x128xf32>, vector<8x128xf32> -> vector<8x128xf32>
    %166 = vector.extract_strided_slice %143 {offsets = [0, 128], sizes = [8, 128], strides = [1, 1]} : vector<8x256xf32> to vector<8x128xf32>
    %167 = arith.addf %165, %166 : vector<8x128xf32>
    %168 = vector.broadcast %2 : vector<1x128xf32> to vector<8x128xf32>
    %169 = arith.addf %167, %168 : vector<8x128xf32>
    %170 = arith.negf %169 : vector<8x128xf32>
    %171 = math.exp %170 : vector<8x128xf32>
    %cst_29 = arith.constant 1.000000e+00 : f32
    %172 = vector.broadcast %cst_29 : f32 to vector<8x128xf32>
    %173 = arith.addf %172, %171 : vector<8x128xf32>
    %174 = arith.divf %172, %173 : vector<8x128xf32>
    %175 = math.tanh %169 : vector<8x128xf32>
    %176 = arith.select %8, %175, %174 : vector<8x128xi1>, vector<8x128xf32>
    %177 = vector.extract_strided_slice %176 {offsets = [0, 0], sizes = [8, 32], strides = [1, 1]} : vector<8x128xf32> to vector<8x32xf32>
    %178 = vector.extract_strided_slice %176 {offsets = [0, 32], sizes = [8, 32], strides = [1, 1]} : vector<8x128xf32> to vector<8x32xf32>
    %179 = vector.extract_strided_slice %176 {offsets = [0, 64], sizes = [8, 32], strides = [1, 1]} : vector<8x128xf32> to vector<8x32xf32>
    %180 = vector.extract_strided_slice %176 {offsets = [0, 96], sizes = [8, 32], strides = [1, 1]} : vector<8x128xf32> to vector<8x32xf32>
    %181 = arith.mulf %178, %139 : vector<8x32xf32>
    %182 = arith.mulf %177, %179 : vector<8x32xf32>
    %183 = arith.addf %181, %182 : vector<8x32xf32>
    %184 = math.tanh %183 : vector<8x32xf32>
    %185 = arith.mulf %180, %184 : vector<8x32xf32>
    %186 = tpu.concatenate %164, %185 in 1 : vector<8x32xf32>, vector<8x32xf32> -> vector<8x64xf32>
    %c4_i32 = arith.constant 4 : i32
    %cst_30 = arith.constant dense<0.000000e+00> : vector<8x256xf32>
    %187 = tpu.matmul %186, %0, %cst_30 {dimension_numbers = #tpu.dot_dimension_numbers<[1], [0], [0], [1], [0, 0, 1, 1], [], []>} : vector<8x64xf32>, vector<64x256xf32>, vector<8x256xf32> -> vector<8x256xf32>
    %188 = arith.index_cast %c4_i32 : i32 to index
    %c0_31 = arith.constant 0 : index
    %c0_32 = arith.constant 0 : index
    %189 = vector.load %arg0[%188, %c0_31, %c0_32] : memref<8x8x128xf32, #tpu.memory_space<vmem>>, vector<1x8x128xf32>
    %190 = vector.shape_cast %189 : vector<1x8x128xf32> to vector<8x128xf32>
    %191 = vector.extract_strided_slice %187 {offsets = [0, 0], sizes = [8, 128], strides = [1, 1]} : vector<8x256xf32> to vector<8x128xf32>
    %192 = arith.addf %190, %191 : vector<8x128xf32>
    %193 = arith.negf %192 : vector<8x128xf32>
    %194 = math.exp %193 : vector<8x128xf32>
    %cst_33 = arith.constant 1.000000e+00 : f32
    %195 = vector.broadcast %cst_33 : f32 to vector<8x128xf32>
    %196 = arith.addf %195, %194 : vector<8x128xf32>
    %197 = arith.divf %195, %196 : vector<8x128xf32>
    %198 = math.tanh %192 : vector<8x128xf32>
    %199 = arith.select %8, %198, %197 : vector<8x128xi1>, vector<8x128xf32>
    %200 = vector.extract_strided_slice %199 {offsets = [0, 0], sizes = [8, 32], strides = [1, 1]} : vector<8x128xf32> to vector<8x32xf32>
    %201 = vector.extract_strided_slice %199 {offsets = [0, 32], sizes = [8, 32], strides = [1, 1]} : vector<8x128xf32> to vector<8x32xf32>
    %202 = vector.extract_strided_slice %199 {offsets = [0, 64], sizes = [8, 32], strides = [1, 1]} : vector<8x128xf32> to vector<8x32xf32>
    %203 = vector.extract_strided_slice %199 {offsets = [0, 96], sizes = [8, 32], strides = [1, 1]} : vector<8x128xf32> to vector<8x32xf32>
    %204 = arith.mulf %201, %162 : vector<8x32xf32>
    %205 = arith.mulf %200, %202 : vector<8x32xf32>
    %206 = arith.addf %204, %205 : vector<8x32xf32>
    %207 = math.tanh %206 : vector<8x32xf32>
    %208 = arith.mulf %203, %207 : vector<8x32xf32>
    %cst_34 = arith.constant dense<0.000000e+00> : vector<8x128xf32>
    %209 = tpu.matmul %208, %1, %cst_34 {dimension_numbers = #tpu.dot_dimension_numbers<[1], [0], [0], [1], [0, 0, 1, 1], [], []>} : vector<8x32xf32>, vector<32x128xf32>, vector<8x128xf32> -> vector<8x128xf32>
    %210 = vector.extract_strided_slice %187 {offsets = [0, 128], sizes = [8, 128], strides = [1, 1]} : vector<8x256xf32> to vector<8x128xf32>
    %211 = arith.addf %209, %210 : vector<8x128xf32>
    %212 = vector.broadcast %2 : vector<1x128xf32> to vector<8x128xf32>
    %213 = arith.addf %211, %212 : vector<8x128xf32>
    %214 = arith.negf %213 : vector<8x128xf32>
    %215 = math.exp %214 : vector<8x128xf32>
    %cst_35 = arith.constant 1.000000e+00 : f32
    %216 = vector.broadcast %cst_35 : f32 to vector<8x128xf32>
    %217 = arith.addf %216, %215 : vector<8x128xf32>
    %218 = arith.divf %216, %217 : vector<8x128xf32>
    %219 = math.tanh %213 : vector<8x128xf32>
    %220 = arith.select %8, %219, %218 : vector<8x128xi1>, vector<8x128xf32>
    %221 = vector.extract_strided_slice %220 {offsets = [0, 0], sizes = [8, 32], strides = [1, 1]} : vector<8x128xf32> to vector<8x32xf32>
    %222 = vector.extract_strided_slice %220 {offsets = [0, 32], sizes = [8, 32], strides = [1, 1]} : vector<8x128xf32> to vector<8x32xf32>
    %223 = vector.extract_strided_slice %220 {offsets = [0, 64], sizes = [8, 32], strides = [1, 1]} : vector<8x128xf32> to vector<8x32xf32>
    %224 = vector.extract_strided_slice %220 {offsets = [0, 96], sizes = [8, 32], strides = [1, 1]} : vector<8x128xf32> to vector<8x32xf32>
    %225 = arith.mulf %222, %183 : vector<8x32xf32>
    %226 = arith.mulf %221, %223 : vector<8x32xf32>
    %227 = arith.addf %225, %226 : vector<8x32xf32>
    %228 = math.tanh %227 : vector<8x32xf32>
    %229 = arith.mulf %224, %228 : vector<8x32xf32>
    %230 = tpu.concatenate %208, %229 in 1 : vector<8x32xf32>, vector<8x32xf32> -> vector<8x64xf32>
    %c5_i32 = arith.constant 5 : i32
    %cst_36 = arith.constant dense<0.000000e+00> : vector<8x256xf32>
    %231 = tpu.matmul %230, %0, %cst_36 {dimension_numbers = #tpu.dot_dimension_numbers<[1], [0], [0], [1], [0, 0, 1, 1], [], []>} : vector<8x64xf32>, vector<64x256xf32>, vector<8x256xf32> -> vector<8x256xf32>
    %232 = arith.index_cast %c5_i32 : i32 to index
    %c0_37 = arith.constant 0 : index
    %c0_38 = arith.constant 0 : index
    %233 = vector.load %arg0[%232, %c0_37, %c0_38] : memref<8x8x128xf32, #tpu.memory_space<vmem>>, vector<1x8x128xf32>
    %234 = vector.shape_cast %233 : vector<1x8x128xf32> to vector<8x128xf32>
    %235 = vector.extract_strided_slice %231 {offsets = [0, 0], sizes = [8, 128], strides = [1, 1]} : vector<8x256xf32> to vector<8x128xf32>
    %236 = arith.addf %234, %235 : vector<8x128xf32>
    %237 = arith.negf %236 : vector<8x128xf32>
    %238 = math.exp %237 : vector<8x128xf32>
    %cst_39 = arith.constant 1.000000e+00 : f32
    %239 = vector.broadcast %cst_39 : f32 to vector<8x128xf32>
    %240 = arith.addf %239, %238 : vector<8x128xf32>
    %241 = arith.divf %239, %240 : vector<8x128xf32>
    %242 = math.tanh %236 : vector<8x128xf32>
    %243 = arith.select %8, %242, %241 : vector<8x128xi1>, vector<8x128xf32>
    %244 = vector.extract_strided_slice %243 {offsets = [0, 0], sizes = [8, 32], strides = [1, 1]} : vector<8x128xf32> to vector<8x32xf32>
    %245 = vector.extract_strided_slice %243 {offsets = [0, 32], sizes = [8, 32], strides = [1, 1]} : vector<8x128xf32> to vector<8x32xf32>
    %246 = vector.extract_strided_slice %243 {offsets = [0, 64], sizes = [8, 32], strides = [1, 1]} : vector<8x128xf32> to vector<8x32xf32>
    %247 = vector.extract_strided_slice %243 {offsets = [0, 96], sizes = [8, 32], strides = [1, 1]} : vector<8x128xf32> to vector<8x32xf32>
    %248 = arith.mulf %245, %206 : vector<8x32xf32>
    %249 = arith.mulf %244, %246 : vector<8x32xf32>
    %250 = arith.addf %248, %249 : vector<8x32xf32>
    %251 = math.tanh %250 : vector<8x32xf32>
    %252 = arith.mulf %247, %251 : vector<8x32xf32>
    %cst_40 = arith.constant dense<0.000000e+00> : vector<8x128xf32>
    %253 = tpu.matmul %252, %1, %cst_40 {dimension_numbers = #tpu.dot_dimension_numbers<[1], [0], [0], [1], [0, 0, 1, 1], [], []>} : vector<8x32xf32>, vector<32x128xf32>, vector<8x128xf32> -> vector<8x128xf32>
    %254 = vector.extract_strided_slice %231 {offsets = [0, 128], sizes = [8, 128], strides = [1, 1]} : vector<8x256xf32> to vector<8x128xf32>
    %255 = arith.addf %253, %254 : vector<8x128xf32>
    %256 = vector.broadcast %2 : vector<1x128xf32> to vector<8x128xf32>
    %257 = arith.addf %255, %256 : vector<8x128xf32>
    %258 = arith.negf %257 : vector<8x128xf32>
    %259 = math.exp %258 : vector<8x128xf32>
    %cst_41 = arith.constant 1.000000e+00 : f32
    %260 = vector.broadcast %cst_41 : f32 to vector<8x128xf32>
    %261 = arith.addf %260, %259 : vector<8x128xf32>
    %262 = arith.divf %260, %261 : vector<8x128xf32>
    %263 = math.tanh %257 : vector<8x128xf32>
    %264 = arith.select %8, %263, %262 : vector<8x128xi1>, vector<8x128xf32>
    %265 = vector.extract_strided_slice %264 {offsets = [0, 0], sizes = [8, 32], strides = [1, 1]} : vector<8x128xf32> to vector<8x32xf32>
    %266 = vector.extract_strided_slice %264 {offsets = [0, 32], sizes = [8, 32], strides = [1, 1]} : vector<8x128xf32> to vector<8x32xf32>
    %267 = vector.extract_strided_slice %264 {offsets = [0, 64], sizes = [8, 32], strides = [1, 1]} : vector<8x128xf32> to vector<8x32xf32>
    %268 = vector.extract_strided_slice %264 {offsets = [0, 96], sizes = [8, 32], strides = [1, 1]} : vector<8x128xf32> to vector<8x32xf32>
    %269 = arith.mulf %266, %227 : vector<8x32xf32>
    %270 = arith.mulf %265, %267 : vector<8x32xf32>
    %271 = arith.addf %269, %270 : vector<8x32xf32>
    %272 = math.tanh %271 : vector<8x32xf32>
    %273 = arith.mulf %268, %272 : vector<8x32xf32>
    %274 = tpu.concatenate %252, %273 in 1 : vector<8x32xf32>, vector<8x32xf32> -> vector<8x64xf32>
    %c6_i32 = arith.constant 6 : i32
    %cst_42 = arith.constant dense<0.000000e+00> : vector<8x256xf32>
    %275 = tpu.matmul %274, %0, %cst_42 {dimension_numbers = #tpu.dot_dimension_numbers<[1], [0], [0], [1], [0, 0, 1, 1], [], []>} : vector<8x64xf32>, vector<64x256xf32>, vector<8x256xf32> -> vector<8x256xf32>
    %276 = arith.index_cast %c6_i32 : i32 to index
    %c0_43 = arith.constant 0 : index
    %c0_44 = arith.constant 0 : index
    %277 = vector.load %arg0[%276, %c0_43, %c0_44] : memref<8x8x128xf32, #tpu.memory_space<vmem>>, vector<1x8x128xf32>
    %278 = vector.shape_cast %277 : vector<1x8x128xf32> to vector<8x128xf32>
    %279 = vector.extract_strided_slice %275 {offsets = [0, 0], sizes = [8, 128], strides = [1, 1]} : vector<8x256xf32> to vector<8x128xf32>
    %280 = arith.addf %278, %279 : vector<8x128xf32>
    %281 = arith.negf %280 : vector<8x128xf32>
    %282 = math.exp %281 : vector<8x128xf32>
    %cst_45 = arith.constant 1.000000e+00 : f32
    %283 = vector.broadcast %cst_45 : f32 to vector<8x128xf32>
    %284 = arith.addf %283, %282 : vector<8x128xf32>
    %285 = arith.divf %283, %284 : vector<8x128xf32>
    %286 = math.tanh %280 : vector<8x128xf32>
    %287 = arith.select %8, %286, %285 : vector<8x128xi1>, vector<8x128xf32>
    %288 = vector.extract_strided_slice %287 {offsets = [0, 0], sizes = [8, 32], strides = [1, 1]} : vector<8x128xf32> to vector<8x32xf32>
    %289 = vector.extract_strided_slice %287 {offsets = [0, 32], sizes = [8, 32], strides = [1, 1]} : vector<8x128xf32> to vector<8x32xf32>
    %290 = vector.extract_strided_slice %287 {offsets = [0, 64], sizes = [8, 32], strides = [1, 1]} : vector<8x128xf32> to vector<8x32xf32>
    %291 = vector.extract_strided_slice %287 {offsets = [0, 96], sizes = [8, 32], strides = [1, 1]} : vector<8x128xf32> to vector<8x32xf32>
    %292 = arith.mulf %289, %250 : vector<8x32xf32>
    %293 = arith.mulf %288, %290 : vector<8x32xf32>
    %294 = arith.addf %292, %293 : vector<8x32xf32>
    %295 = math.tanh %294 : vector<8x32xf32>
    %296 = arith.mulf %291, %295 : vector<8x32xf32>
    %cst_46 = arith.constant dense<0.000000e+00> : vector<8x128xf32>
    %297 = tpu.matmul %296, %1, %cst_46 {dimension_numbers = #tpu.dot_dimension_numbers<[1], [0], [0], [1], [0, 0, 1, 1], [], []>} : vector<8x32xf32>, vector<32x128xf32>, vector<8x128xf32> -> vector<8x128xf32>
    %298 = vector.extract_strided_slice %275 {offsets = [0, 128], sizes = [8, 128], strides = [1, 1]} : vector<8x256xf32> to vector<8x128xf32>
    %299 = arith.addf %297, %298 : vector<8x128xf32>
    %300 = vector.broadcast %2 : vector<1x128xf32> to vector<8x128xf32>
    %301 = arith.addf %299, %300 : vector<8x128xf32>
    %302 = arith.negf %301 : vector<8x128xf32>
    %303 = math.exp %302 : vector<8x128xf32>
    %cst_47 = arith.constant 1.000000e+00 : f32
    %304 = vector.broadcast %cst_47 : f32 to vector<8x128xf32>
    %305 = arith.addf %304, %303 : vector<8x128xf32>
    %306 = arith.divf %304, %305 : vector<8x128xf32>
    %307 = math.tanh %301 : vector<8x128xf32>
    %308 = arith.select %8, %307, %306 : vector<8x128xi1>, vector<8x128xf32>
    %309 = vector.extract_strided_slice %308 {offsets = [0, 0], sizes = [8, 32], strides = [1, 1]} : vector<8x128xf32> to vector<8x32xf32>
    %310 = vector.extract_strided_slice %308 {offsets = [0, 32], sizes = [8, 32], strides = [1, 1]} : vector<8x128xf32> to vector<8x32xf32>
    %311 = vector.extract_strided_slice %308 {offsets = [0, 64], sizes = [8, 32], strides = [1, 1]} : vector<8x128xf32> to vector<8x32xf32>
    %312 = vector.extract_strided_slice %308 {offsets = [0, 96], sizes = [8, 32], strides = [1, 1]} : vector<8x128xf32> to vector<8x32xf32>
    %313 = arith.mulf %310, %271 : vector<8x32xf32>
    %314 = arith.mulf %309, %311 : vector<8x32xf32>
    %315 = arith.addf %313, %314 : vector<8x32xf32>
    %316 = math.tanh %315 : vector<8x32xf32>
    %317 = arith.mulf %312, %316 : vector<8x32xf32>
    %318 = tpu.concatenate %296, %317 in 1 : vector<8x32xf32>, vector<8x32xf32> -> vector<8x64xf32>
    %c7_i32 = arith.constant 7 : i32
    %cst_48 = arith.constant dense<0.000000e+00> : vector<8x256xf32>
    %319 = tpu.matmul %318, %0, %cst_48 {dimension_numbers = #tpu.dot_dimension_numbers<[1], [0], [0], [1], [0, 0, 1, 1], [], []>} : vector<8x64xf32>, vector<64x256xf32>, vector<8x256xf32> -> vector<8x256xf32>
    %320 = arith.index_cast %c7_i32 : i32 to index
    %c0_49 = arith.constant 0 : index
    %c0_50 = arith.constant 0 : index
    %321 = vector.load %arg0[%320, %c0_49, %c0_50] : memref<8x8x128xf32, #tpu.memory_space<vmem>>, vector<1x8x128xf32>
    %322 = vector.shape_cast %321 : vector<1x8x128xf32> to vector<8x128xf32>
    %323 = vector.extract_strided_slice %319 {offsets = [0, 0], sizes = [8, 128], strides = [1, 1]} : vector<8x256xf32> to vector<8x128xf32>
    %324 = arith.addf %322, %323 : vector<8x128xf32>
    %325 = arith.negf %324 : vector<8x128xf32>
    %326 = math.exp %325 : vector<8x128xf32>
    %cst_51 = arith.constant 1.000000e+00 : f32
    %327 = vector.broadcast %cst_51 : f32 to vector<8x128xf32>
    %328 = arith.addf %327, %326 : vector<8x128xf32>
    %329 = arith.divf %327, %328 : vector<8x128xf32>
    %330 = math.tanh %324 : vector<8x128xf32>
    %331 = arith.select %8, %330, %329 : vector<8x128xi1>, vector<8x128xf32>
    %332 = vector.extract_strided_slice %331 {offsets = [0, 0], sizes = [8, 32], strides = [1, 1]} : vector<8x128xf32> to vector<8x32xf32>
    %333 = vector.extract_strided_slice %331 {offsets = [0, 32], sizes = [8, 32], strides = [1, 1]} : vector<8x128xf32> to vector<8x32xf32>
    %334 = vector.extract_strided_slice %331 {offsets = [0, 64], sizes = [8, 32], strides = [1, 1]} : vector<8x128xf32> to vector<8x32xf32>
    %335 = vector.extract_strided_slice %331 {offsets = [0, 96], sizes = [8, 32], strides = [1, 1]} : vector<8x128xf32> to vector<8x32xf32>
    %336 = arith.mulf %333, %294 : vector<8x32xf32>
    %337 = arith.mulf %332, %334 : vector<8x32xf32>
    %338 = arith.addf %336, %337 : vector<8x32xf32>
    %339 = math.tanh %338 : vector<8x32xf32>
    %340 = arith.mulf %335, %339 : vector<8x32xf32>
    %cst_52 = arith.constant dense<0.000000e+00> : vector<8x128xf32>
    %341 = tpu.matmul %340, %1, %cst_52 {dimension_numbers = #tpu.dot_dimension_numbers<[1], [0], [0], [1], [0, 0, 1, 1], [], []>} : vector<8x32xf32>, vector<32x128xf32>, vector<8x128xf32> -> vector<8x128xf32>
    %342 = vector.extract_strided_slice %319 {offsets = [0, 128], sizes = [8, 128], strides = [1, 1]} : vector<8x256xf32> to vector<8x128xf32>
    %343 = arith.addf %341, %342 : vector<8x128xf32>
    %344 = vector.broadcast %2 : vector<1x128xf32> to vector<8x128xf32>
    %345 = arith.addf %343, %344 : vector<8x128xf32>
    %346 = arith.negf %345 : vector<8x128xf32>
    %347 = math.exp %346 : vector<8x128xf32>
    %cst_53 = arith.constant 1.000000e+00 : f32
    %348 = vector.broadcast %cst_53 : f32 to vector<8x128xf32>
    %349 = arith.addf %348, %347 : vector<8x128xf32>
    %350 = arith.divf %348, %349 : vector<8x128xf32>
    %351 = math.tanh %345 : vector<8x128xf32>
    %352 = arith.select %8, %351, %350 : vector<8x128xi1>, vector<8x128xf32>
    %353 = vector.extract_strided_slice %352 {offsets = [0, 0], sizes = [8, 32], strides = [1, 1]} : vector<8x128xf32> to vector<8x32xf32>
    %354 = vector.extract_strided_slice %352 {offsets = [0, 32], sizes = [8, 32], strides = [1, 1]} : vector<8x128xf32> to vector<8x32xf32>
    %355 = vector.extract_strided_slice %352 {offsets = [0, 64], sizes = [8, 32], strides = [1, 1]} : vector<8x128xf32> to vector<8x32xf32>
    %356 = vector.extract_strided_slice %352 {offsets = [0, 96], sizes = [8, 32], strides = [1, 1]} : vector<8x128xf32> to vector<8x32xf32>
    %357 = arith.mulf %354, %315 : vector<8x32xf32>
    %358 = arith.mulf %353, %355 : vector<8x32xf32>
    %359 = arith.addf %357, %358 : vector<8x32xf32>
    %360 = math.tanh %359 : vector<8x32xf32>
    %361 = arith.mulf %356, %360 : vector<8x32xf32>
    %362 = tpu.concatenate %340, %361 in 1 : vector<8x32xf32>, vector<8x32xf32> -> vector<8x64xf32>
    %c8_i32 = arith.constant 8 : i32
    %363 = vector.extract_strided_slice %362 {offsets = [0, 32], sizes = [8, 32], strides = [1, 1]} : vector<8x64xf32> to vector<8x32xf32>
    %c0_54 = arith.constant 0 : index
    %c0_55 = arith.constant 0 : index
    %364 = vector.load %arg4[%c0_54, %c0_55] : memref<1x32xf32, #tpu.memory_space<vmem>>, vector<1x32xf32>
    %365 = vector.broadcast %364 : vector<1x32xf32> to vector<8x32xf32>
    %366 = arith.mulf %363, %365 : vector<8x32xf32>
    %cst_56 = arith.constant dense<0.000000e+00> : vector<8xf32>
    %367 = vector.multi_reduction <add>, %366, %cst_56 [1] : vector<8x32xf32> to vector<8xf32>
    %368 = vector.shape_cast %367 : vector<8xf32> to vector<8x1xf32>
    %c0_57 = arith.constant 0 : index
    %c0_58 = arith.constant 0 : index
    %369 = vector.load %arg5[%c0_57, %c0_58] : memref<1x1xf32, #tpu.memory_space<vmem>>, vector<1x1xf32>
    %370 = vector.broadcast %369 : vector<1x1xf32> to vector<8x1xf32>
    %371 = arith.addf %368, %370 : vector<8x1xf32>
    %c0_59 = arith.constant 0 : index
    %c0_60 = arith.constant 0 : index
    %372 = vector.load %arg6[%c0_59, %c0_60] : memref<8x1xf32, #tpu.memory_space<vmem>>, vector<8x1xf32>
    tpu.vector_store %arg6[%c0_59, %c0_60], %371 {strides = array<i32>} : memref<8x1xf32, #tpu.memory_space<vmem>>, vector<8x1xf32>,
    return
  }
}

</mosaic_0001>

<llo_original>
// kernel: tpu_custom_call.1
$region0: #{tpu_custom_call.1}
  #allocation0 [shape = 'u32[]', space=smem, size = 0x4, offset = 0x4, fixed_abs, tag = 'smem constant byte address 0x4 - core index']
  #allocation1 [shape = 'u32[144,128]{1,0:T(1,128)}', space=vmem, size = 0x12000, scoped, tag = 'internal scratch']
  #allocation2 [shape = 'f32[1,1]{1,0:T(1,128)S(1)}', space=vmem, size = 0x200, scoped, tag = 'scoped memory for tpu_custom_call.1']
  %s0 = inlined_call_operand.hbm [shape: f32[8,8,128], index: 0, kind: input, shape index: {}]
  %s1 = inlined_call_operand.hbm [shape: f32[64,256], index: 1, kind: input, shape index: {}]
  %s2 = inlined_call_operand.hbm [shape: f32[32,128], index: 2, kind: input, shape index: {}]
  %s3 = inlined_call_operand.vmem [shape: f32[1,128], index: 3, kind: input, shape index: {}]
  %s4 = inlined_call_operand.vmem [shape: f32[1,32], index: 4, kind: input, shape index: {}]
  %s5 = inlined_call_operand.<no memory space> [shape: f32[1,1], index: 5, kind: input, shape index: {}]
  %s6 = inlined_call_operand.vmem [shape: f32[8,1], index: 6, kind: output, shape index: {}]
  %s7 = sld [smem:[#allocation0]]
  $region46: #{tpu_custom_call.1} parent=0
    _
  %s9 = ssub.s32 1, %s7
  %s10 = scalar_select 0, %s9, %s7
  %v11 = vstv %s5
  %12 = vst [vmem:[#allocation2] sm:$0x1] %v11
  $region1: #{tpu_custom_call.1} parent=0
    #allocation3 [shape = 'u8[32768]{0}', space=vmem, size = 0x8000, scoped, tag = 'input window, operand 0, single buffered']
    #allocation4 [shape = 's32[1]{0}', space=sflag, size = 0x4, scoped, tag = 'scoped memory for tpu_custom_call.1']
    #allocation5 [shape = 'u8[65536]{0}', space=vmem, size = 0x10000, scoped, tag = 'input window, operand 1, single buffered']
    #allocation6 [shape = 's32[1]{0}', space=sflag, size = 0x4, scoped, tag = 'scoped memory for tpu_custom_call.1']
    #allocation7 [shape = 'u8[16384]{0}', space=vmem, size = 0x4000, scoped, tag = 'input window, operand 2, single buffered']
    %13 = vsyncpa [#allocation4], 0
    %14 = vsyncpa [#allocation6], 0
    // Predicated region
    $region2: #{tpu_custom_call.1} parent=1 // pred_check
      _
    $region3: #{tpu_custom_call.1} parent=1 // pred_check_branch
      %16 = sbr.rel (0) target = $region5
    $region4: #{tpu_custom_call.1} parent=1 // pred_region
      %s18 = ssub.s32 1024, 1024
      %19 = vsyncadd [#allocation4], %s18
      %s20 = sshll.u32 [#allocation3], 4
      %s21 = int_to_ptr.vmem [resolvable:$true] %s20
      %26 = dma.hbm_to_vmem [thread:$0]  %s0, 1024, %s21, [#allocation4], 128, 128, 8
    $region5: #{tpu_custom_call.1} parent=1 // pred_fallthru
      _
    // Predicated region
    $region6: #{tpu_custom_call.1} parent=1 // pred_check
      _
    $region7: #{tpu_custom_call.1} parent=1 // pred_check_branch
      %28 = sbr.rel (0) target = $region9
    $region8: #{tpu_custom_call.1} parent=1 // pred_region
      %s30 = ssub.s32 2048, 2048
      %31 = vsyncadd [#allocation6], %s30
      %s32 = sshll.u32 [#allocation5], 4
      %s33 = int_to_ptr.vmem [resolvable:$true] %s32
      %38 = dma.hbm_to_vmem [thread:$0]  %s1, 2048, %s33, [#allocation6], 256, 256, 16
    $region9: #{tpu_custom_call.1} parent=1 // pred_fallthru
      _
    // Predicated region
    $region10: #{tpu_custom_call.1} parent=1 // pred_check
      _
    $region11: #{tpu_custom_call.1} parent=1 // pred_check_branch
      %40 = sbr.rel (0) target = $region13
    $region12: #{tpu_custom_call.1} parent=1 // pred_region
      %s42 = ssub.s32 512, 512
      %43 = vsyncadd [#allocation6], %s42
      %s44 = sshll.u32 [#allocation7], 4
      %s45 = int_to_ptr.vmem [resolvable:$true] %s44
      %50 = dma.hbm_to_vmem [thread:$0]  %s2, 512, %s45, [#allocation6], 128, 128, 8
    $region13: #{tpu_custom_call.1} parent=1 // pred_fallthru
      _
    // Predicated region
    $region14: #{tpu_custom_call.1} parent=1 // pred_check
      _
    $region15: #{tpu_custom_call.1} parent=1 // pred_check_branch
      %52 = sbr.rel (0) target = $region17
    $region16: #{tpu_custom_call.1} parent=1 // pred_region
      _
    $region17: #{tpu_custom_call.1} parent=1 // pred_fallthru
      _
    // Predicated region
    $region18: #{tpu_custom_call.1} parent=1 // pred_check
      _
    $region19: #{tpu_custom_call.1} parent=1 // pred_check_branch
      %54 = sbr.rel (0) target = $region21
    $region20: #{tpu_custom_call.1} parent=1 // pred_region
      _
    $region21: #{tpu_custom_call.1} parent=1 // pred_fallthru
      _
    // Predicated region
    $region22: #{tpu_custom_call.1} parent=1 // pred_check
      _
    $region23: #{tpu_custom_call.1} parent=1 // pred_check_branch
      %56 = sbr.rel (0) target = $region25
    $region24: #{tpu_custom_call.1} parent=1 // pred_region
      _
    $region25: #{tpu_custom_call.1} parent=1 // pred_fallthru
      _
    // Predicated region
    $region26: #{tpu_custom_call.1} parent=1 // pred_check
      _
    $region27: #{tpu_custom_call.1} parent=1 // pred_check_branch
      %58 = sbr.rel (0) target = $region29
    $region28: #{tpu_custom_call.1} parent=1 // pred_region
      %59 = dma.done [#allocation4], 1024
    $region29: #{tpu_custom_call.1} parent=1 // pred_fallthru
      _
    // Predicated region
    $region30: #{tpu_custom_call.1} parent=1 // pred_check
      _
    $region31: #{tpu_custom_call.1} parent=1 // pred_check_branch
      %61 = sbr.rel (0) target = $region33
    $region32: #{tpu_custom_call.1} parent=1 // pred_region
      %62 = dma.done [#allocation6], 2048
    $region33: #{tpu_custom_call.1} parent=1 // pred_fallthru
      _
    // Predicated region
    $region34: #{tpu_custom_call.1} parent=1 // pred_check
      _
    $region35: #{tpu_custom_call.1} parent=1 // pred_check_branch
      %64 = sbr.rel (0) target = $region37
    $region36: #{tpu_custom_call.1} parent=1 // pred_region
      %65 = dma.done [#allocation6], 512
    $region37: #{tpu_custom_call.1} parent=1 // pred_fallthru
      _
    %v66 = vld [vmem:[#allocation5] sm:$0xff]
    %v67 = vld [vmem:[#allocation5 + $0x8] sm:$0xff]
    %v68 = vld [vmem:[#allocation5 + $0x10] sm:$0xff]
    %v69 = vld [vmem:[#allocation5 + $0x18] sm:$0xff]
    %v70 = vld [vmem:[#allocation5 + $0x20] sm:$0xff]
    %v71 = vld [vmem:[#allocation5 + $0x28] sm:$0xff]
    %v72 = vld [vmem:[#allocation5 + $0x30] sm:$0xff]
    %v73 = vld [vmem:[#allocation5 + $0x38] sm:$0xff]
    %v74 = vld [vmem:[#allocation5 + $0x40] sm:$0xff]
    %v75 = vld [vmem:[#allocation5 + $0x48] sm:$0xff]
    %v76 = vld [vmem:[#allocation5 + $0x50] sm:$0xff]
    %v77 = vld [vmem:[#allocation5 + $0x58] sm:$0xff]
    %v78 = vld [vmem:[#allocation5 + $0x60] sm:$0xff]
    %v79 = vld [vmem:[#allocation5 + $0x68] sm:$0xff]
    %v80 = vld [vmem:[#allocation5 + $0x70] sm:$0xff]
    %v81 = vld [vmem:[#allocation5 + $0x78] sm:$0xff]
    %v82 = vld [vmem:[#allocation7] sm:$0xff]
    %v83 = vld [vmem:[#allocation7 + $0x8] sm:$0xff]
    %v84 = vld [vmem:[#allocation7 + $0x10] sm:$0xff]
    %v85 = vld [vmem:[#allocation7 + $0x18] sm:$0xff]
    %v86 = vld [vmem:[%s3] sm:$0x1]
    %v87 = vlaneseq
    %v88 = vand.u32 %v87, 127
    %vm89 = vcmp.ge.s32.totalorder %v88, 64
    %vm90 = vcmp.lt.s32.totalorder %v88, 96
    %vm91 = vmand %vm89, %vm90
    %vm92 = vcmask 523264
    %v94 = vsel %vm92, 0.0, 0
    %96 = vmatprep.subr.mxu0 0.0
    %97 = vmatpush1.msra.mxu0 0.0
    %98 = vmatprep.subr.mxu0 0.0
    %99 = vmatpush1.msra.mxu0 0.0
    %100 = vmatprep.subr.mxu0 0.0
    %101 = vmatpush1.msra.mxu0 0.0
    %102 = vmatprep.subr.mxu0 0.0
    %103 = vmatpush1.msra.mxu0 0.0
    %104 = vmatprep.subr.mxu0 0.0
    %105 = vmatpush1.msra.mxu0 0.0
    %106 = vmatprep.subr.mxu0 0.0
    %107 = vmatpush1.msra.mxu0 0.0
    %108 = vmatprep.subr.mxu0 0.0
    %109 = vmatpush1.msra.mxu0 0.0
    %110 = vmatprep.subr.mxu0 0.0
    %111 = vmatpush1.msra.mxu0 0.0
    %112 = vmatprep.subr.mxu0 %v81
    %113 = vmatpush1.msra.mxu0 %v80
    %114 = vmatprep.subr.mxu0 %v79
    %115 = vmatpush1.msra.mxu0 %v78
    %116 = vmatprep.subr.mxu0 %v77
    %117 = vmatpush1.msra.mxu0 %v76
    %118 = vmatprep.subr.mxu0 %v75
    %119 = vmatpush1.msra.mxu0 %v74
    %120 = vmatprep.subr.mxu0 %v73
    %121 = vmatpush1.msra.mxu0 %v72
    %122 = vmatprep.subr.mxu0 %v71
    %123 = vmatpush1.msra.mxu0 %v70
    %124 = vmatprep.subr.mxu0 %v69
    %125 = vmatpush1.msra.mxu0 %v68
    %126 = vmatprep.subr.mxu0 %v67
    %127 = vmatpush1.msra.mxu0 %v66
    %128 = vmatprep.subr.mxu0 0.0
    %129 = vmatpush2.msra.mxu0 0.0
    %130 = vmatprep.subr.mxu0 0.0
    %131 = vmatpush2.msra.mxu0 0.0
    %132 = vmatprep.subr.mxu0 0.0
    %133 = vmatpush2.msra.mxu0 0.0
    %134 = vmatprep.subr.mxu0 0.0
    %135 = vmatpush2.msra.mxu0 0.0
    %136 = vmatprep.subr.mxu0 0.0
    %137 = vmatpush2.msra.mxu0 0.0
    %138 = vmatprep.subr.mxu0 0.0
    %139 = vmatpush2.msra.mxu0 0.0
    %140 = vmatprep.subr.mxu0 0.0
    %141 = vmatpush2.msra.mxu0 0.0
    %142 = vmatprep.subr.mxu0 0.0
    %143 = vmatpush2.msra.mxu0 0.0
    %144 = vmatprep.subr.mxu0 0.0
    %145 = vmatpush2.msra.mxu0 0.0
    %146 = vmatprep.subr.mxu0 0.0
    %147 = vmatpush2.msra.mxu0 0.0
    %148 = vmatprep.subr.mxu0 0.0
    %149 = vmatpush2.msra.mxu0 0.0
    %150 = vmatprep.subr.mxu0 0.0
    %151 = vmatpush2.msra.mxu0 0.0
    %152 = vmatprep.subr.mxu0 0.0
    %153 = vmatpush2.msra.mxu0 0.0
    %154 = vmatprep.subr.mxu0 0.0
    %155 = vmatpush2.msra.mxu0 0.0
    %156 = vmatprep.subr.mxu0 0.0
    %157 = vmatpush2.msra.mxu0 0.0
    %158 = vmatprep.subr.mxu0 0.0
    %159 = vmatpush2.msra.mxu0 0.0
    %160 = vmatprep.mubr.f32.mxu0 0.0
    %161 = vmatmul.mubr.f32.gmra.mxu0 %v94
    %v162 = vpop.f32.mrf.mxu0
    %v163 = vadd.f32 0.0, %v162
    %v164 = vpop.f32.mrf.mxu0
    %v165 = vadd.f32 0.0, %v164
    %166 = vdwg.mxu0
    %v167 = vld [vmem:[#allocation3] sm:$0xff]
    %v168 = vadd.f32 %v167, %v163
    %v169 = vxor.u32 %v168, 2147483648
    %v170 = vmul.f32 %v169, 1.442695
    %v171 = vpow.pop %v170
    %v172 = vadd.f32 %v171, 1.0
    %v173 = vrcp.pop %v172
    %v174 = vmul.f32 1.0, %v173
    %v175 = vtanh.pop %v168
    %v176 = vsel %vm91, %v175, %v174
    %v177 = vmul.f32 %v176, 0.0
    %179 = vrot.lane.b32.xlu0 %v176, 64
    %v180 = vpop.permute.xlu0 %179
    %v182 = vmul.f32 %v176, %v180
    %184 = vrot.lane.b32.xlu0 %v182, 32
    %v185 = vpop.permute.xlu0 %184
    %v187 = vadd.f32 %v177, %v185
    %v188 = vtanh.pop %v187
    %190 = vrot.lane.b32.xlu0 %v188, 64
    %v191 = vpop.permute.xlu0 %190
    %v193 = vmul.f32 %v176, %v191
    %195 = vrot.lane.b32.xlu0 %v193, 32
    %v196 = vpop.permute.xlu0 %195
    %vm197 = vcmask 261120
    %v198 = vsel %vm197, %v196, 0
    %200 = vmatprep.subr.mxu0 0.0
    %201 = vmatpush1.msra.mxu0 0.0
    %202 = vmatprep.subr.mxu0 0.0
    %203 = vmatpush1.msra.mxu0 0.0
    %204 = vmatprep.subr.mxu0 0.0
    %205 = vmatpush1.msra.mxu0 0.0
    %206 = vmatprep.subr.mxu0 0.0
    %207 = vmatpush1.msra.mxu0 0.0
    %208 = vmatprep.subr.mxu0 0.0
    %209 = vmatpush1.msra.mxu0 0.0
    %210 = vmatprep.subr.mxu0 0.0
    %211 = vmatpush1.msra.mxu0 0.0
    %212 = vmatprep.subr.mxu0 0.0
    %213 = vmatpush1.msra.mxu0 0.0
    %214 = vmatprep.subr.mxu0 0.0
    %215 = vmatpush1.msra.mxu0 0.0
    %216 = vmatprep.subr.mxu0 0.0
    %217 = vmatpush1.msra.mxu0 0.0
    %218 = vmatprep.subr.mxu0 0.0
    %219 = vmatpush1.msra.mxu0 0.0
    %220 = vmatprep.subr.mxu0 0.0
    %221 = vmatpush1.msra.mxu0 0.0
    %222 = vmatprep.subr.mxu0 0.0
    %223 = vmatpush1.msra.mxu0 0.0
    %224 = vmatprep.subr.mxu0 0.0
    %225 = vmatpush1.msra.mxu0 %v85
    %226 = vmatprep.subr.mxu0 0.0
    %227 = vmatpush1.msra.mxu0 %v84
    %228 = vmatprep.subr.mxu0 0.0
    %229 = vmatpush1.msra.mxu0 %v83
    %230 = vmatprep.subr.mxu0 0.0
    %231 = vmatpush1.msra.mxu0 %v82
    %232 = vmatprep.subr.mxu0 0.0
    %233 = vmatpush2.msra.mxu0 0.0
    %234 = vmatprep.subr.mxu0 0.0
    %235 = vmatpush2.msra.mxu0 0.0
    %236 = vmatprep.subr.mxu0 0.0
    %237 = vmatpush2.msra.mxu0 0.0
    %238 = vmatprep.subr.mxu0 0.0
    %239 = vmatpush2.msra.mxu0 0.0
    %240 = vmatprep.subr.mxu0 0.0
    %241 = vmatpush2.msra.mxu0 0.0
    %242 = vmatprep.subr.mxu0 0.0
    %243 = vmatpush2.msra.mxu0 0.0
    %244 = vmatprep.subr.mxu0 0.0
    %245 = vmatpush2.msra.mxu0 0.0
    %246 = vmatprep.subr.mxu0 0.0
    %247 = vmatpush2.msra.mxu0 0.0
    %248 = vmatprep.subr.mxu0 0.0
    %249 = vmatpush2.msra.mxu0 0.0
    %250 = vmatprep.subr.mxu0 0.0
    %251 = vmatpush2.msra.mxu0 0.0
    %252 = vmatprep.subr.mxu0 0.0
    %253 = vmatpush2.msra.mxu0 0.0
    %254 = vmatprep.subr.mxu0 0.0
    %255 = vmatpush2.msra.mxu0 0.0
    %256 = vmatprep.subr.mxu0 0.0
    %257 = vmatpush2.msra.mxu0 0.0
    %258 = vmatprep.subr.mxu0 0.0
    %259 = vmatpush2.msra.mxu0 0.0
    %260 = vmatprep.subr.mxu0 0.0
    %261 = vmatpush2.msra.mxu0 0.0
    %262 = vmatprep.subr.mxu0 0.0
    %263 = vmatpush2.msra.mxu0 0.0
    %264 = vmatprep.mubr.f32.mxu0 0.0
    %265 = vmatmul.mubr.f32.gmra.mxu0 %v198
    %v266 = vpop.f32.mrf.mxu0
    %v267 = vadd.f32 %v165, %v266
    %v268 = vpop.f32.mrf.mxu0
    %269 = vdwg.mxu0
    %v271 = vlaneseq
    %v272 = vshrl.u32 %v271, 7
    %v273 = vsub.s32 0, %v272
    %v274 = vrot.slane %v86, %v273
    %v276 = vadd.f32 %v267, %v274
    %v277 = vxor.u32 %v276, 2147483648
    %v278 = vmul.f32 %v277, 1.442695
    %v279 = vpow.pop %v278
    %v280 = vadd.f32 %v279, 1.0
    %v281 = vrcp.pop %v280
    %v282 = vmul.f32 1.0, %v281
    %v283 = vtanh.pop %v276
    %v284 = vsel %vm91, %v283, %v282
    %v285 = vmul.f32 %v284, 0.0
    %287 = vrot.lane.b32.xlu0 %v284, 64
    %v288 = vpop.permute.xlu0 %287
    %v290 = vmul.f32 %v284, %v288
    %292 = vrot.lane.b32.xlu0 %v290, 32
    %v293 = vpop.permute.xlu0 %292
    %v295 = vadd.f32 %v285, %v293
    %v296 = vtanh.pop %v295
    %298 = vrot.lane.b32.xlu0 %v296, 64
    %v299 = vpop.permute.xlu0 %298
    %v301 = vmul.f32 %v284, %v299
    %304 = vrot.lane.b32.xlu0 %v301, 64
    %v305 = vpop.permute.xlu0 %304
    %v307 = vsel %vm197, %v196, %v305
    %v309 = vsel %vm92, %v307, 0
    %311 = vmatprep.subr.mxu0 0.0
    %312 = vmatpush1.msra.mxu0 0.0
    %313 = vmatprep.subr.mxu0 0.0
    %314 = vmatpush1.msra.mxu0 0.0
    %315 = vmatprep.subr.mxu0 0.0
    %316 = vmatpush1.msra.mxu0 0.0
    %317 = vmatprep.subr.mxu0 0.0
    %318 = vmatpush1.msra.mxu0 0.0
    %319 = vmatprep.subr.mxu0 0.0
    %320 = vmatpush1.msra.mxu0 0.0
    %321 = vmatprep.subr.mxu0 0.0
    %322 = vmatpush1.msra.mxu0 0.0
    %323 = vmatprep.subr.mxu0 0.0
    %324 = vmatpush1.msra.mxu0 0.0
    %325 = vmatprep.subr.mxu0 0.0
    %326 = vmatpush1.msra.mxu0 0.0
    %327 = vmatprep.subr.mxu0 %v81
    %328 = vmatpush1.msra.mxu0 %v80
    %329 = vmatprep.subr.mxu0 %v79
    %330 = vmatpush1.msra.mxu0 %v78
    %331 = vmatprep.subr.mxu0 %v77
    %332 = vmatpush1.msra.mxu0 %v76
    %333 = vmatprep.subr.mxu0 %v75
    %334 = vmatpush1.msra.mxu0 %v74
    %335 = vmatprep.subr.mxu0 %v73
    %336 = vmatpush1.msra.mxu0 %v72
    %337 = vmatprep.subr.mxu0 %v71
    %338 = vmatpush1.msra.mxu0 %v70
    %339 = vmatprep.subr.mxu0 %v69
    %340 = vmatpush1.msra.mxu0 %v68
    %341 = vmatprep.subr.mxu0 %v67
    %342 = vmatpush1.msra.mxu0 %v66
    %343 = vmatprep.subr.mxu0 0.0
    %344 = vmatpush2.msra.mxu0 0.0
    %345 = vmatprep.subr.mxu0 0.0
    %346 = vmatpush2.msra.mxu0 0.0
    %347 = vmatprep.subr.mxu0 0.0
    %348 = vmatpush2.msra.mxu0 0.0
    %349 = vmatprep.subr.mxu0 0.0
    %350 = vmatpush2.msra.mxu0 0.0
    %351 = vmatprep.subr.mxu0 0.0
    %352 = vmatpush2.msra.mxu0 0.0
    %353 = vmatprep.subr.mxu0 0.0
    %354 = vmatpush2.msra.mxu0 0.0
    %355 = vmatprep.subr.mxu0 0.0
    %356 = vmatpush2.msra.mxu0 0.0
    %357 = vmatprep.subr.mxu0 0.0
    %358 = vmatpush2.msra.mxu0 0.0
    %359 = vmatprep.subr.mxu0 0.0
    %360 = vmatpush2.msra.mxu0 0.0
    %361 = vmatprep.subr.mxu0 0.0
    %362 = vmatpush2.msra.mxu0 0.0
    %363 = vmatprep.subr.mxu0 0.0
    %364 = vmatpush2.msra.mxu0 0.0
    %365 = vmatprep.subr.mxu0 0.0
    %366 = vmatpush2.msra.mxu0 0.0
    %367 = vmatprep.subr.mxu0 0.0
    %368 = vmatpush2.msra.mxu0 0.0
    %369 = vmatprep.subr.mxu0 0.0
    %370 = vmatpush2.msra.mxu0 0.0
    %371 = vmatprep.subr.mxu0 0.0
    %372 = vmatpush2.msra.mxu0 0.0
    %373 = vmatprep.subr.mxu0 0.0
    %374 = vmatpush2.msra.mxu0 0.0
    %375 = vmatprep.mubr.f32.mxu0 0.0
    %376 = vmatmul.mubr.f32.gmra.mxu0 %v309
    %v377 = vpop.f32.mrf.mxu0
    %v378 = vadd.f32 0.0, %v377
    %v379 = vpop.f32.mrf.mxu0
    %v380 = vadd.f32 0.0, %v379
    %381 = vdwg.mxu0
    %s382 = scalar_lea.vmem [#allocation3], 8
    %v383 = vld [vmem:[%s382] sm:$0xff]
    %v384 = vadd.f32 %v383, %v378
    %v385 = vxor.u32 %v384, 2147483648
    %v386 = vmul.f32 %v385, 1.442695
    %v387 = vpow.pop %v386
    %v388 = vadd.f32 %v387, 1.0
    %v389 = vrcp.pop %v388
    %v390 = vmul.f32 1.0, %v389
    %v391 = vtanh.pop %v384
    %v392 = vsel %vm91, %v391, %v390
    %v393 = vmul.f32 %v392, %v187
    %395 = vrot.lane.b32.xlu0 %v392, 64
    %v396 = vpop.permute.xlu0 %395
    %v398 = vmul.f32 %v392, %v396
    %400 = vrot.lane.b32.xlu0 %v398, 32
    %v401 = vpop.permute.xlu0 %400
    %v403 = vadd.f32 %v393, %v401
    %v404 = vtanh.pop %v403
    %406 = vrot.lane.b32.xlu0 %v404, 64
    %v407 = vpop.permute.xlu0 %406
    %v409 = vmul.f32 %v392, %v407
    %411 = vrot.lane.b32.xlu0 %v409, 32
    %v412 = vpop.permute.xlu0 %411
    %v413 = vsel %vm197, %v412, 0
    %415 = vmatprep.subr.mxu0 0.0
    %416 = vmatpush1.msra.mxu0 0.0
    %417 = vmatprep.subr.mxu0 0.0
    %418 = vmatpush1.msra.mxu0 0.0
    %419 = vmatprep.subr.mxu0 0.0
    %420 = vmatpush1.msra.mxu0 0.0
    %421 = vmatprep.subr.mxu0 0.0
    %422 = vmatpush1.msra.mxu0 0.0
    %423 = vmatprep.subr.mxu0 0.0
    %424 = vmatpush1.msra.mxu0 0.0
    %425 = vmatprep.subr.mxu0 0.0
    %426 = vmatpush1.msra.mxu0 0.0
    %427 = vmatprep.subr.mxu0 0.0
    %428 = vmatpush1.msra.mxu0 0.0
    %429 = vmatprep.subr.mxu0 0.0
    %430 = vmatpush1.msra.mxu0 0.0
    %431 = vmatprep.subr.mxu0 0.0
    %432 = vmatpush1.msra.mxu0 0.0
    %433 = vmatprep.subr.mxu0 0.0
    %434 = vmatpush1.msra.mxu0 0.0
    %435 = vmatprep.subr.mxu0 0.0
    %436 = vmatpush1.msra.mxu0 0.0
    %437 = vmatprep.subr.mxu0 0.0
    %438 = vmatpush1.msra.mxu0 0.0
    %439 = vmatprep.subr.mxu0 0.0
    %440 = vmatpush1.msra.mxu0 %v85
    %441 = vmatprep.subr.mxu0 0.0
    %442 = vmatpush1.msra.mxu0 %v84
    %443 = vmatprep.subr.mxu0 0.0
    %444 = vmatpush1.msra.mxu0 %v83
    %445 = vmatprep.subr.mxu0 0.0
    %446 = vmatpush1.msra.mxu0 %v82
    %447 = vmatprep.subr.mxu0 0.0
    %448 = vmatpush2.msra.mxu0 0.0
    %449 = vmatprep.subr.mxu0 0.0
    %450 = vmatpush2.msra.mxu0 0.0
    %451 = vmatprep.subr.mxu0 0.0
    %452 = vmatpush2.msra.mxu0 0.0
    %453 = vmatprep.subr.mxu0 0.0
    %454 = vmatpush2.msra.mxu0 0.0
    %455 = vmatprep.subr.mxu0 0.0
    %456 = vmatpush2.msra.mxu0 0.0
    %457 = vmatprep.subr.mxu0 0.0
    %458 = vmatpush2.msra.mxu0 0.0
    %459 = vmatprep.subr.mxu0 0.0
    %460 = vmatpush2.msra.mxu0 0.0
    %461 = vmatprep.subr.mxu0 0.0
    %462 = vmatpush2.msra.mxu0 0.0
    %463 = vmatprep.subr.mxu0 0.0
    %464 = vmatpush2.msra.mxu0 0.0
    %465 = vmatprep.subr.mxu0 0.0
    %466 = vmatpush2.msra.mxu0 0.0
    %467 = vmatprep.subr.mxu0 0.0
    %468 = vmatpush2.msra.mxu0 0.0
    %469 = vmatprep.subr.mxu0 0.0
    %470 = vmatpush2.msra.mxu0 0.0
    %471 = vmatprep.subr.mxu0 0.0
    %472 = vmatpush2.msra.mxu0 0.0
    %473 = vmatprep.subr.mxu0 0.0
    %474 = vmatpush2.msra.mxu0 0.0
    %475 = vmatprep.subr.mxu0 0.0
    %476 = vmatpush2.msra.mxu0 0.0
    %477 = vmatprep.subr.mxu0 0.0
    %478 = vmatpush2.msra.mxu0 0.0
    %479 = vmatprep.mubr.f32.mxu0 0.0
    %480 = vmatmul.mubr.f32.gmra.mxu0 %v413
    %v481 = vpop.f32.mrf.mxu0
    %v482 = vadd.f32 %v380, %v481
    %v483 = vpop.f32.mrf.mxu0
    %484 = vdwg.mxu0
    %v485 = vadd.f32 %v482, %v274
    %v486 = vxor.u32 %v485, 2147483648
    %v487 = vmul.f32 %v486, 1.442695
    %v488 = vpow.pop %v487
    %v489 = vadd.f32 %v488, 1.0
    %v490 = vrcp.pop %v489
    %v491 = vmul.f32 1.0, %v490
    %v492 = vtanh.pop %v485
    %v493 = vsel %vm91, %v492, %v491
    %v494 = vmul.f32 %v493, %v295
    %496 = vrot.lane.b32.xlu0 %v493, 64
    %v497 = vpop.permute.xlu0 %496
    %v499 = vmul.f32 %v493, %v497
    %501 = vrot.lane.b32.xlu0 %v499, 32
    %v502 = vpop.permute.xlu0 %501
    %v504 = vadd.f32 %v494, %v502
    %v505 = vtanh.pop %v504
    %507 = vrot.lane.b32.xlu0 %v505, 64
    %v508 = vpop.permute.xlu0 %507
    %v510 = vmul.f32 %v493, %v508
    %513 = vrot.lane.b32.xlu0 %v510, 64
    %v514 = vpop.permute.xlu0 %513
    %v516 = vsel %vm197, %v412, %v514
    %v518 = vsel %vm92, %v516, 0
    %520 = vmatprep.subr.mxu0 0.0
    %521 = vmatpush1.msra.mxu0 0.0
    %522 = vmatprep.subr.mxu0 0.0
    %523 = vmatpush1.msra.mxu0 0.0
    %524 = vmatprep.subr.mxu0 0.0
    %525 = vmatpush1.msra.mxu0 0.0
    %526 = vmatprep.subr.mxu0 0.0
    %527 = vmatpush1.msra.mxu0 0.0
    %528 = vmatprep.subr.mxu0 0.0
    %529 = vmatpush1.msra.mxu0 0.0
    %530 = vmatprep.subr.mxu0 0.0
    %531 = vmatpush1.msra.mxu0 0.0
    %532 = vmatprep.subr.mxu0 0.0
    %533 = vmatpush1.msra.mxu0 0.0
    %534 = vmatprep.subr.mxu0 0.0
    %535 = vmatpush1.msra.mxu0 0.0
    %536 = vmatprep.subr.mxu0 %v81
    %537 = vmatpush1.msra.mxu0 %v80
    %538 = vmatprep.subr.mxu0 %v79
    %539 = vmatpush1.msra.mxu0 %v78
    %540 = vmatprep.subr.mxu0 %v77
    %541 = vmatpush1.msra.mxu0 %v76
    %542 = vmatprep.subr.mxu0 %v75
    %543 = vmatpush1.msra.mxu0 %v74
    %544 = vmatprep.subr.mxu0 %v73
    %545 = vmatpush1.msra.mxu0 %v72
    %546 = vmatprep.subr.mxu0 %v71
    %547 = vmatpush1.msra.mxu0 %v70
    %548 = vmatprep.subr.mxu0 %v69
    %549 = vmatpush1.msra.mxu0 %v68
    %550 = vmatprep.subr.mxu0 %v67
    %551 = vmatpush1.msra.mxu0 %v66
    %552 = vmatprep.subr.mxu0 0.0
    %553 = vmatpush2.msra.mxu0 0.0
    %554 = vmatprep.subr.mxu0 0.0
    %555 = vmatpush2.msra.mxu0 0.0
    %556 = vmatprep.subr.mxu0 0.0
    %557 = vmatpush2.msra.mxu0 0.0
    %558 = vmatprep.subr.mxu0 0.0
    %559 = vmatpush2.msra.mxu0 0.0
    %560 = vmatprep.subr.mxu0 0.0
    %561 = vmatpush2.msra.mxu0 0.0
    %562 = vmatprep.subr.mxu0 0.0
    %563 = vmatpush2.msra.mxu0 0.0
    %564 = vmatprep.subr.mxu0 0.0
    %565 = vmatpush2.msra.mxu0 0.0
    %566 = vmatprep.subr.mxu0 0.0
    %567 = vmatpush2.msra.mxu0 0.0
    %568 = vmatprep.subr.mxu0 0.0
    %569 = vmatpush2.msra.mxu0 0.0
    %570 = vmatprep.subr.mxu0 0.0
    %571 = vmatpush2.msra.mxu0 0.0
    %572 = vmatprep.subr.mxu0 0.0
    %573 = vmatpush2.msra.mxu0 0.0
    %574 = vmatprep.subr.mxu0 0.0
    %575 = vmatpush2.msra.mxu0 0.0
    %576 = vmatprep.subr.mxu0 0.0
    %577 = vmatpush2.msra.mxu0 0.0
    %578 = vmatprep.subr.mxu0 0.0
    %579 = vmatpush2.msra.mxu0 0.0
    %580 = vmatprep.subr.mxu0 0.0
    %581 = vmatpush2.msra.mxu0 0.0
    %582 = vmatprep.subr.mxu0 0.0
    %583 = vmatpush2.msra.mxu0 0.0
    %584 = vmatprep.mubr.f32.mxu0 0.0
    %585 = vmatmul.mubr.f32.gmra.mxu0 %v518
    %v586 = vpop.f32.mrf.mxu0
    %v587 = vadd.f32 0.0, %v586
    %v588 = vpop.f32.mrf.mxu0
    %v589 = vadd.f32 0.0, %v588
    %590 = vdwg.mxu0
    %s591 = scalar_lea.vmem [#allocation3], 16
    %v592 = vld [vmem:[%s591] sm:$0xff]
    %v593 = vadd.f32 %v592, %v587
    %v594 = vxor.u32 %v593, 2147483648
    %v595 = vmul.f32 %v594, 1.442695
    %v596 = vpow.pop %v595
    %v597 = vadd.f32 %v596, 1.0
    %v598 = vrcp.pop %v597
    %v599 = vmul.f32 1.0, %v598
    %v600 = vtanh.pop %v593
    %v601 = vsel %vm91, %v600, %v599
    %v602 = vmul.f32 %v601, %v403
    %604 = vrot.lane.b32.xlu0 %v601, 64
    %v605 = vpop.permute.xlu0 %604
    %v607 = vmul.f32 %v601, %v605
    %609 = vrot.lane.b32.xlu0 %v607, 32
    %v610 = vpop.permute.xlu0 %609
    %v612 = vadd.f32 %v602, %v610
    %v613 = vtanh.pop %v612
    %615 = vrot.lane.b32.xlu0 %v613, 64
    %v616 = vpop.permute.xlu0 %615
    %v618 = vmul.f32 %v601, %v616
    %620 = vrot.lane.b32.xlu0 %v618, 32
    %v621 = vpop.permute.xlu0 %620
    %v622 = vsel %vm197, %v621, 0
    %624 = vmatprep.subr.mxu0 0.0
    %625 = vmatpush1.msra.mxu0 0.0
    %626 = vmatprep.subr.mxu0 0.0
    %627 = vmatpush1.msra.mxu0 0.0
    %628 = vmatprep.subr.mxu0 0.0
    %629 = vmatpush1.msra.mxu0 0.0
    %630 = vmatprep.subr.mxu0 0.0
    %631 = vmatpush1.msra.mxu0 0.0
    %632 = vmatprep.subr.mxu0 0.0
    %633 = vmatpush1.msra.mxu0 0.0
    %634 = vmatprep.subr.mxu0 0.0
    %635 = vmatpush1.msra.mxu0 0.0
    %636 = vmatprep.subr.mxu0 0.0
    %637 = vmatpush1.msra.mxu0 0.0
    %638 = vmatprep.subr.mxu0 0.0
    %639 = vmatpush1.msra.mxu0 0.0
    %640 = vmatprep.subr.mxu0 0.0
    %641 = vmatpush1.msra.mxu0 0.0
    %642 = vmatprep.subr.mxu0 0.0
    %643 = vmatpush1.msra.mxu0 0.0
    %644 = vmatprep.subr.mxu0 0.0
    %645 = vmatpush1.msra.mxu0 0.0
    %646 = vmatprep.subr.mxu0 0.0
    %647 = vmatpush1.msra.mxu0 0.0
    %648 = vmatprep.subr.mxu0 0.0
    %649 = vmatpush1.msra.mxu0 %v85
    %650 = vmatprep.subr.mxu0 0.0
    %651 = vmatpush1.msra.mxu0 %v84
    %652 = vmatprep.subr.mxu0 0.0
    %653 = vmatpush1.msra.mxu0 %v83
    %654 = vmatprep.subr.mxu0 0.0
    %655 = vmatpush1.msra.mxu0 %v82
    %656 = vmatprep.subr.mxu0 0.0
    %657 = vmatpush2.msra.mxu0 0.0
    %658 = vmatprep.subr.mxu0 0.0
    %659 = vmatpush2.msra.mxu0 0.0
    %660 = vmatprep.subr.mxu0 0.0
    %661 = vmatpush2.msra.mxu0 0.0
    %662 = vmatprep.subr.mxu0 0.0
    %663 = vmatpush2.msra.mxu0 0.0
    %664 = vmatprep.subr.mxu0 0.0
    %665 = vmatpush2.msra.mxu0 0.0
    %666 = vmatprep.subr.mxu0 0.0
    %667 = vmatpush2.msra.mxu0 0.0
    %668 = vmatprep.subr.mxu0 0.0
    %669 = vmatpush2.msra.mxu0 0.0
    %670 = vmatprep.subr.mxu0 0.0
    %671 = vmatpush2.msra.mxu0 0.0
    %672 = vmatprep.subr.mxu0 0.0
    %673 = vmatpush2.msra.mxu0 0.0
    %674 = vmatprep.subr.mxu0 0.0
    %675 = vmatpush2.msra.mxu0 0.0
    %676 = vmatprep.subr.mxu0 0.0
    %677 = vmatpush2.msra.mxu0 0.0
    %678 = vmatprep.subr.mxu0 0.0
    %679 = vmatpush2.msra.mxu0 0.0
    %680 = vmatprep.subr.mxu0 0.0
    %681 = vmatpush2.msra.mxu0 0.0
    %682 = vmatprep.subr.mxu0 0.0
    %683 = vmatpush2.msra.mxu0 0.0
    %684 = vmatprep.subr.mxu0 0.0
    %685 = vmatpush2.msra.mxu0 0.0
    %686 = vmatprep.subr.mxu0 0.0
    %687 = vmatpush2.msra.mxu0 0.0
    %688 = vmatprep.mubr.f32.mxu0 0.0
    %689 = vmatmul.mubr.f32.gmra.mxu0 %v622
    %v690 = vpop.f32.mrf.mxu0
    %v691 = vadd.f32 %v589, %v690
    %v692 = vpop.f32.mrf.mxu0
    %693 = vdwg.mxu0
    %v694 = vadd.f32 %v691, %v274
    %v695 = vxor.u32 %v694, 2147483648
    %v696 = vmul.f32 %v695, 1.442695
    %v697 = vpow.pop %v696
    %v698 = vadd.f32 %v697, 1.0
    %v699 = vrcp.pop %v698
    %v700 = vmul.f32 1.0, %v699
    %v701 = vtanh.pop %v694
    %v702 = vsel %vm91, %v701, %v700
    %v703 = vmul.f32 %v702, %v504
    %705 = vrot.lane.b32.xlu0 %v702, 64
    %v706 = vpop.permute.xlu0 %705
    %v708 = vmul.f32 %v702, %v706
    %710 = vrot.lane.b32.xlu0 %v708, 32
    %v711 = vpop.permute.xlu0 %710
    %v713 = vadd.f32 %v703, %v711
    %v714 = vtanh.pop %v713
    %716 = vrot.lane.b32.xlu0 %v714, 64
    %v717 = vpop.permute.xlu0 %716
    %v719 = vmul.f32 %v702, %v717
    %722 = vrot.lane.b32.xlu0 %v719, 64
    %v723 = vpop.permute.xlu0 %722
    %v725 = vsel %vm197, %v621, %v723
    %v727 = vsel %vm92, %v725, 0
    %729 = vmatprep.subr.mxu0 0.0
    %730 = vmatpush1.msra.mxu0 0.0
    %731 = vmatprep.subr.mxu0 0.0
    %732 = vmatpush1.msra.mxu0 0.0
    %733 = vmatprep.subr.mxu0 0.0
    %734 = vmatpush1.msra.mxu0 0.0
    %735 = vmatprep.subr.mxu0 0.0
    %736 = vmatpush1.msra.mxu0 0.0
    %737 = vmatprep.subr.mxu0 0.0
    %738 = vmatpush1.msra.mxu0 0.0
    %739 = vmatprep.subr.mxu0 0.0
    %740 = vmatpush1.msra.mxu0 0.0
    %741 = vmatprep.subr.mxu0 0.0
    %742 = vmatpush1.msra.mxu0 0.0
    %743 = vmatprep.subr.mxu0 0.0
    %744 = vmatpush1.msra.mxu0 0.0
    %745 = vmatprep.subr.mxu0 %v81
    %746 = vmatpush1.msra.mxu0 %v80
    %747 = vmatprep.subr.mxu0 %v79
    %748 = vmatpush1.msra.mxu0 %v78
    %749 = vmatprep.subr.mxu0 %v77
    %750 = vmatpush1.msra.mxu0 %v76
    %751 = vmatprep.subr.mxu0 %v75
    %752 = vmatpush1.msra.mxu0 %v74
    %753 = vmatprep.subr.mxu0 %v73
    %754 = vmatpush1.msra.mxu0 %v72
    %755 = vmatprep.subr.mxu0 %v71
    %756 = vmatpush1.msra.mxu0 %v70
    %757 = vmatprep.subr.mxu0 %v69
    %758 = vmatpush1.msra.mxu0 %v68
    %759 = vmatprep.subr.mxu0 %v67
    %760 = vmatpush1.msra.mxu0 %v66
    %761 = vmatprep.subr.mxu0 0.0
    %762 = vmatpush2.msra.mxu0 0.0
    %763 = vmatprep.subr.mxu0 0.0
    %764 = vmatpush2.msra.mxu0 0.0
    %765 = vmatprep.subr.mxu0 0.0
    %766 = vmatpush2.msra.mxu0 0.0
    %767 = vmatprep.subr.mxu0 0.0
    %768 = vmatpush2.msra.mxu0 0.0
    %769 = vmatprep.subr.mxu0 0.0
    %770 = vmatpush2.msra.mxu0 0.0
    %771 = vmatprep.subr.mxu0 0.0
    %772 = vmatpush2.msra.mxu0 0.0
    %773 = vmatprep.subr.mxu0 0.0
    %774 = vmatpush2.msra.mxu0 0.0
    %775 = vmatprep.subr.mxu0 0.0
    %776 = vmatpush2.msra.mxu0 0.0
    %777 = vmatprep.subr.mxu0 0.0
    %778 = vmatpush2.msra.mxu0 0.0
    %779 = vmatprep.subr.mxu0 0.0
    %780 = vmatpush2.msra.mxu0 0.0
    %781 = vmatprep.subr.mxu0 0.0
    %782 = vmatpush2.msra.mxu0 0.0
    %783 = vmatprep.subr.mxu0 0.0
    %784 = vmatpush2.msra.mxu0 0.0
    %785 = vmatprep.subr.mxu0 0.0
    %786 = vmatpush2.msra.mxu0 0.0
    %787 = vmatprep.subr.mxu0 0.0
    %788 = vmatpush2.msra.mxu0 0.0
    %789 = vmatprep.subr.mxu0 0.0
    %790 = vmatpush2.msra.mxu0 0.0
    %791 = vmatprep.subr.mxu0 0.0
    %792 = vmatpush2.msra.mxu0 0.0
    %793 = vmatprep.mubr.f32.mxu0 0.0
    %794 = vmatmul.mubr.f32.gmra.mxu0 %v727
    %v795 = vpop.f32.mrf.mxu0
    %v796 = vadd.f32 0.0, %v795
    %v797 = vpop.f32.mrf.mxu0
    %v798 = vadd.f32 0.0, %v797
    %799 = vdwg.mxu0
    %s800 = scalar_lea.vmem [#allocation3], 24
    %v801 = vld [vmem:[%s800] sm:$0xff]
    %v802 = vadd.f32 %v801, %v796
    %v803 = vxor.u32 %v802, 2147483648
    %v804 = vmul.f32 %v803, 1.442695
    %v805 = vpow.pop %v804
    %v806 = vadd.f32 %v805, 1.0
    %v807 = vrcp.pop %v806
    %v808 = vmul.f32 1.0, %v807
    %v809 = vtanh.pop %v802
    %v810 = vsel %vm91, %v809, %v808
    %v811 = vmul.f32 %v810, %v612
    %813 = vrot.lane.b32.xlu0 %v810, 64
    %v814 = vpop.permute.xlu0 %813
    %v816 = vmul.f32 %v810, %v814
    %818 = vrot.lane.b32.xlu0 %v816, 32
    %v819 = vpop.permute.xlu0 %818
    %v821 = vadd.f32 %v811, %v819
    %v822 = vtanh.pop %v821
    %824 = vrot.lane.b32.xlu0 %v822, 64
    %v825 = vpop.permute.xlu0 %824
    %v827 = vmul.f32 %v810, %v825
    %829 = vrot.lane.b32.xlu0 %v827, 32
    %v830 = vpop.permute.xlu0 %829
    %v831 = vsel %vm197, %v830, 0
    %833 = vmatprep.subr.mxu0 0.0
    %834 = vmatpush1.msra.mxu0 0.0
    %835 = vmatprep.subr.mxu0 0.0
    %836 = vmatpush1.msra.mxu0 0.0
    %837 = vmatprep.subr.mxu0 0.0
    %838 = vmatpush1.msra.mxu0 0.0
    %839 = vmatprep.subr.mxu0 0.0
    %840 = vmatpush1.msra.mxu0 0.0
    %841 = vmatprep.subr.mxu0 0.0
    %842 = vmatpush1.msra.mxu0 0.0
    %843 = vmatprep.subr.mxu0 0.0
    %844 = vmatpush1.msra.mxu0 0.0
    %845 = vmatprep.subr.mxu0 0.0
    %846 = vmatpush1.msra.mxu0 0.0
    %847 = vmatprep.subr.mxu0 0.0
    %848 = vmatpush1.msra.mxu0 0.0
    %849 = vmatprep.subr.mxu0 0.0
    %850 = vmatpush1.msra.mxu0 0.0
    %851 = vmatprep.subr.mxu0 0.0
    %852 = vmatpush1.msra.mxu0 0.0
    %853 = vmatprep.subr.mxu0 0.0
    %854 = vmatpush1.msra.mxu0 0.0
    %855 = vmatprep.subr.mxu0 0.0
    %856 = vmatpush1.msra.mxu0 0.0
    %857 = vmatprep.subr.mxu0 0.0
    %858 = vmatpush1.msra.mxu0 %v85
    %859 = vmatprep.subr.mxu0 0.0
    %860 = vmatpush1.msra.mxu0 %v84
    %861 = vmatprep.subr.mxu0 0.0
    %862 = vmatpush1.msra.mxu0 %v83
    %863 = vmatprep.subr.mxu0 0.0
    %864 = vmatpush1.msra.mxu0 %v82
    %865 = vmatprep.subr.mxu0 0.0
    %866 = vmatpush2.msra.mxu0 0.0
    %867 = vmatprep.subr.mxu0 0.0
    %868 = vmatpush2.msra.mxu0 0.0
    %869 = vmatprep.subr.mxu0 0.0
    %870 = vmatpush2.msra.mxu0 0.0
    %871 = vmatprep.subr.mxu0 0.0
    %872 = vmatpush2.msra.mxu0 0.0
    %873 = vmatprep.subr.mxu0 0.0
    %874 = vmatpush2.msra.mxu0 0.0
    %875 = vmatprep.subr.mxu0 0.0
    %876 = vmatpush2.msra.mxu0 0.0
    %877 = vmatprep.subr.mxu0 0.0
    %878 = vmatpush2.msra.mxu0 0.0
    %879 = vmatprep.subr.mxu0 0.0
    %880 = vmatpush2.msra.mxu0 0.0
    %881 = vmatprep.subr.mxu0 0.0
    %882 = vmatpush2.msra.mxu0 0.0
    %883 = vmatprep.subr.mxu0 0.0
    %884 = vmatpush2.msra.mxu0 0.0
    %885 = vmatprep.subr.mxu0 0.0
    %886 = vmatpush2.msra.mxu0 0.0
    %887 = vmatprep.subr.mxu0 0.0
    %888 = vmatpush2.msra.mxu0 0.0
    %889 = vmatprep.subr.mxu0 0.0
    %890 = vmatpush2.msra.mxu0 0.0
    %891 = vmatprep.subr.mxu0 0.0
    %892 = vmatpush2.msra.mxu0 0.0
    %893 = vmatprep.subr.mxu0 0.0
    %894 = vmatpush2.msra.mxu0 0.0
    %895 = vmatprep.subr.mxu0 0.0
    %896 = vmatpush2.msra.mxu0 0.0
    %897 = vmatprep.mubr.f32.mxu0 0.0
    %898 = vmatmul.mubr.f32.gmra.mxu0 %v831
    %v899 = vpop.f32.mrf.mxu0
    %v900 = vadd.f32 %v798, %v899
    %v901 = vpop.f32.mrf.mxu0
    %902 = vdwg.mxu0
    %v903 = vadd.f32 %v900, %v274
    %v904 = vxor.u32 %v903, 2147483648
    %v905 = vmul.f32 %v904, 1.442695
    %v906 = vpow.pop %v905
    %v907 = vadd.f32 %v906, 1.0
    %v908 = vrcp.pop %v907
    %v909 = vmul.f32 1.0, %v908
    %v910 = vtanh.pop %v903
    %v911 = vsel %vm91, %v910, %v909
    %v912 = vmul.f32 %v911, %v713
    %914 = vrot.lane.b32.xlu0 %v911, 64
    %v915 = vpop.permute.xlu0 %914
    %v917 = vmul.f32 %v911, %v915
    %919 = vrot.lane.b32.xlu0 %v917, 32
    %v920 = vpop.permute.xlu0 %919
    %v922 = vadd.f32 %v912, %v920
    %v923 = vtanh.pop %v922
    %925 = vrot.lane.b32.xlu0 %v923, 64
    %v926 = vpop.permute.xlu0 %925
    %v928 = vmul.f32 %v911, %v926
    %931 = vrot.lane.b32.xlu0 %v928, 64
    %v932 = vpop.permute.xlu0 %931
    %v934 = vsel %vm197, %v830, %v932
    %v936 = vsel %vm92, %v934, 0
    %938 = vmatprep.subr.mxu0 0.0
    %939 = vmatpush1.msra.mxu0 0.0
    %940 = vmatprep.subr.mxu0 0.0
    %941 = vmatpush1.msra.mxu0 0.0
    %942 = vmatprep.subr.mxu0 0.0
    %943 = vmatpush1.msra.mxu0 0.0
    %944 = vmatprep.subr.mxu0 0.0
    %945 = vmatpush1.msra.mxu0 0.0
    %946 = vmatprep.subr.mxu0 0.0
    %947 = vmatpush1.msra.mxu0 0.0
    %948 = vmatprep.subr.mxu0 0.0
    %949 = vmatpush1.msra.mxu0 0.0
    %950 = vmatprep.subr.mxu0 0.0
    %951 = vmatpush1.msra.mxu0 0.0
    %952 = vmatprep.subr.mxu0 0.0
    %953 = vmatpush1.msra.mxu0 0.0
    %954 = vmatprep.subr.mxu0 %v81
    %955 = vmatpush1.msra.mxu0 %v80
    %956 = vmatprep.subr.mxu0 %v79
    %957 = vmatpush1.msra.mxu0 %v78
    %958 = vmatprep.subr.mxu0 %v77
    %959 = vmatpush1.msra.mxu0 %v76
    %960 = vmatprep.subr.mxu0 %v75
    %961 = vmatpush1.msra.mxu0 %v74
    %962 = vmatprep.subr.mxu0 %v73
    %963 = vmatpush1.msra.mxu0 %v72
    %964 = vmatprep.subr.mxu0 %v71
    %965 = vmatpush1.msra.mxu0 %v70
    %966 = vmatprep.subr.mxu0 %v69
    %967 = vmatpush1.msra.mxu0 %v68
    %968 = vmatprep.subr.mxu0 %v67
    %969 = vmatpush1.msra.mxu0 %v66
    %970 = vmatprep.subr.mxu0 0.0
    %971 = vmatpush2.msra.mxu0 0.0
    %972 = vmatprep.subr.mxu0 0.0
    %973 = vmatpush2.msra.mxu0 0.0
    %974 = vmatprep.subr.mxu0 0.0
    %975 = vmatpush2.msra.mxu0 0.0
    %976 = vmatprep.subr.mxu0 0.0
    %977 = vmatpush2.msra.mxu0 0.0
    %978 = vmatprep.subr.mxu0 0.0
    %979 = vmatpush2.msra.mxu0 0.0
    %980 = vmatprep.subr.mxu0 0.0
    %981 = vmatpush2.msra.mxu0 0.0
    %982 = vmatprep.subr.mxu0 0.0
    %983 = vmatpush2.msra.mxu0 0.0
    %984 = vmatprep.subr.mxu0 0.0
    %985 = vmatpush2.msra.mxu0 0.0
    %986 = vmatprep.subr.mxu0 0.0
    %987 = vmatpush2.msra.mxu0 0.0
    %988 = vmatprep.subr.mxu0 0.0
    %989 = vmatpush2.msra.mxu0 0.0
    %990 = vmatprep.subr.mxu0 0.0
    %991 = vmatpush2.msra.mxu0 0.0
    %992 = vmatprep.subr.mxu0 0.0
    %993 = vmatpush2.msra.mxu0 0.0
    %994 = vmatprep.subr.mxu0 0.0
    %995 = vmatpush2.msra.mxu0 0.0
    %996 = vmatprep.subr.mxu0 0.0
    %997 = vmatpush2.msra.mxu0 0.0
    %998 = vmatprep.subr.mxu0 0.0
    %999 = vmatpush2.msra.mxu0 0.0
    %1000 = vmatprep.subr.mxu0 0.0
    %1001 = vmatpush2.msra.mxu0 0.0
    %1002 = vmatprep.mubr.f32.mxu0 0.0
    %1003 = vmatmul.mubr.f32.gmra.mxu0 %v936
    %v1004 = vpop.f32.mrf.mxu0
    %v1005 = vadd.f32 0.0, %v1004
    %v1006 = vpop.f32.mrf.mxu0
    %v1007 = vadd.f32 0.0, %v1006
    %1008 = vdwg.mxu0
    %s1009 = scalar_lea.vmem [#allocation3], 32
    %v1010 = vld [vmem:[%s1009] sm:$0xff]
    %v1011 = vadd.f32 %v1010, %v1005
    %v1012 = vxor.u32 %v1011, 2147483648
    %v1013 = vmul.f32 %v1012, 1.442695
    %v1014 = vpow.pop %v1013
    %v1015 = vadd.f32 %v1014, 1.0
    %v1016 = vrcp.pop %v1015
    %v1017 = vmul.f32 1.0, %v1016
    %v1018 = vtanh.pop %v1011
    %v1019 = vsel %vm91, %v1018, %v1017
    %v1020 = vmul.f32 %v1019, %v821
    %1022 = vrot.lane.b32.xlu0 %v1019, 64
    %v1023 = vpop.permute.xlu0 %1022
    %v1025 = vmul.f32 %v1019, %v1023
    %1027 = vrot.lane.b32.xlu0 %v1025, 32
    %v1028 = vpop.permute.xlu0 %1027
    %v1030 = vadd.f32 %v1020, %v1028
    %v1031 = vtanh.pop %v1030
    %1033 = vrot.lane.b32.xlu0 %v1031, 64
    %v1034 = vpop.permute.xlu0 %1033
    %v1036 = vmul.f32 %v1019, %v1034
    %1038 = vrot.lane.b32.xlu0 %v1036, 32
    %v1039 = vpop.permute.xlu0 %1038
    %v1040 = vsel %vm197, %v1039, 0
    %1042 = vmatprep.subr.mxu0 0.0
    %1043 = vmatpush1.msra.mxu0 0.0
    %1044 = vmatprep.subr.mxu0 0.0
    %1045 = vmatpush1.msra.mxu0 0.0
    %1046 = vmatprep.subr.mxu0 0.0
    %1047 = vmatpush1.msra.mxu0 0.0
    %1048 = vmatprep.subr.mxu0 0.0
    %1049 = vmatpush1.msra.mxu0 0.0
    %1050 = vmatprep.subr.mxu0 0.0
    %1051 = vmatpush1.msra.mxu0 0.0
    %1052 = vmatprep.subr.mxu0 0.0
    %1053 = vmatpush1.msra.mxu0 0.0
    %1054 = vmatprep.subr.mxu0 0.0
    %1055 = vmatpush1.msra.mxu0 0.0
    %1056 = vmatprep.subr.mxu0 0.0
    %1057 = vmatpush1.msra.mxu0 0.0
    %1058 = vmatprep.subr.mxu0 0.0
    %1059 = vmatpush1.msra.mxu0 0.0
    %1060 = vmatprep.subr.mxu0 0.0
    %1061 = vmatpush1.msra.mxu0 0.0
    %1062 = vmatprep.subr.mxu0 0.0
    %1063 = vmatpush1.msra.mxu0 0.0
    %1064 = vmatprep.subr.mxu0 0.0
    %1065 = vmatpush1.msra.mxu0 0.0
    %1066 = vmatprep.subr.mxu0 0.0
    %1067 = vmatpush1.msra.mxu0 %v85
    %1068 = vmatprep.subr.mxu0 0.0
    %1069 = vmatpush1.msra.mxu0 %v84
    %1070 = vmatprep.subr.mxu0 0.0
    %1071 = vmatpush1.msra.mxu0 %v83
    %1072 = vmatprep.subr.mxu0 0.0
    %1073 = vmatpush1.msra.mxu0 %v82
    %1074 = vmatprep.subr.mxu0 0.0
    %1075 = vmatpush2.msra.mxu0 0.0
    %1076 = vmatprep.subr.mxu0 0.0
    %1077 = vmatpush2.msra.mxu0 0.0
    %1078 = vmatprep.subr.mxu0 0.0
    %1079 = vmatpush2.msra.mxu0 0.0
    %1080 = vmatprep.subr.mxu0 0.0
    %1081 = vmatpush2.msra.mxu0 0.0
    %1082 = vmatprep.subr.mxu0 0.0
    %1083 = vmatpush2.msra.mxu0 0.0
    %1084 = vmatprep.subr.mxu0 0.0
    %1085 = vmatpush2.msra.mxu0 0.0
    %1086 = vmatprep.subr.mxu0 0.0
    %1087 = vmatpush2.msra.mxu0 0.0
    %1088 = vmatprep.subr.mxu0 0.0
    %1089 = vmatpush2.msra.mxu0 0.0
    %1090 = vmatprep.subr.mxu0 0.0
    %1091 = vmatpush2.msra.mxu0 0.0
    %1092 = vmatprep.subr.mxu0 0.0
    %1093 = vmatpush2.msra.mxu0 0.0
    %1094 = vmatprep.subr.mxu0 0.0
    %1095 = vmatpush2.msra.mxu0 0.0
    %1096 = vmatprep.subr.mxu0 0.0
    %1097 = vmatpush2.msra.mxu0 0.0
    %1098 = vmatprep.subr.mxu0 0.0
    %1099 = vmatpush2.msra.mxu0 0.0
    %1100 = vmatprep.subr.mxu0 0.0
    %1101 = vmatpush2.msra.mxu0 0.0
    %1102 = vmatprep.subr.mxu0 0.0
    %1103 = vmatpush2.msra.mxu0 0.0
    %1104 = vmatprep.subr.mxu0 0.0
    %1105 = vmatpush2.msra.mxu0 0.0
    %1106 = vmatprep.mubr.f32.mxu0 0.0
    %1107 = vmatmul.mubr.f32.gmra.mxu0 %v1040
    %v1108 = vpop.f32.mrf.mxu0
    %v1109 = vadd.f32 %v1007, %v1108
    %v1110 = vpop.f32.mrf.mxu0
    %1111 = vdwg.mxu0
    %v1112 = vadd.f32 %v1109, %v274
    %v1113 = vxor.u32 %v1112, 2147483648
    %v1114 = vmul.f32 %v1113, 1.442695
    %v1115 = vpow.pop %v1114
    %v1116 = vadd.f32 %v1115, 1.0
    %v1117 = vrcp.pop %v1116
    %v1118 = vmul.f32 1.0, %v1117
    %v1119 = vtanh.pop %v1112
    %v1120 = vsel %vm91, %v1119, %v1118
    %v1121 = vmul.f32 %v1120, %v922
    %1123 = vrot.lane.b32.xlu0 %v1120, 64
    %v1124 = vpop.permute.xlu0 %1123
    %v1126 = vmul.f32 %v1120, %v1124
    %1128 = vrot.lane.b32.xlu0 %v1126, 32
    %v1129 = vpop.permute.xlu0 %1128
    %v1131 = vadd.f32 %v1121, %v1129
    %v1132 = vtanh.pop %v1131
    %1134 = vrot.lane.b32.xlu0 %v1132, 64
    %v1135 = vpop.permute.xlu0 %1134
    %v1137 = vmul.f32 %v1120, %v1135
    %1140 = vrot.lane.b32.xlu0 %v1137, 64
    %v1141 = vpop.permute.xlu0 %1140
    %v1143 = vsel %vm197, %v1039, %v1141
    %v1145 = vsel %vm92, %v1143, 0
    %1147 = vmatprep.subr.mxu0 0.0
    %1148 = vmatpush1.msra.mxu0 0.0
    %1149 = vmatprep.subr.mxu0 0.0
    %1150 = vmatpush1.msra.mxu0 0.0
    %1151 = vmatprep.subr.mxu0 0.0
    %1152 = vmatpush1.msra.mxu0 0.0
    %1153 = vmatprep.subr.mxu0 0.0
    %1154 = vmatpush1.msra.mxu0 0.0
    %1155 = vmatprep.subr.mxu0 0.0
    %1156 = vmatpush1.msra.mxu0 0.0
    %1157 = vmatprep.subr.mxu0 0.0
    %1158 = vmatpush1.msra.mxu0 0.0
    %1159 = vmatprep.subr.mxu0 0.0
    %1160 = vmatpush1.msra.mxu0 0.0
    %1161 = vmatprep.subr.mxu0 0.0
    %1162 = vmatpush1.msra.mxu0 0.0
    %1163 = vmatprep.subr.mxu0 %v81
    %1164 = vmatpush1.msra.mxu0 %v80
    %1165 = vmatprep.subr.mxu0 %v79
    %1166 = vmatpush1.msra.mxu0 %v78
    %1167 = vmatprep.subr.mxu0 %v77
    %1168 = vmatpush1.msra.mxu0 %v76
    %1169 = vmatprep.subr.mxu0 %v75
    %1170 = vmatpush1.msra.mxu0 %v74
    %1171 = vmatprep.subr.mxu0 %v73
    %1172 = vmatpush1.msra.mxu0 %v72
    %1173 = vmatprep.subr.mxu0 %v71
    %1174 = vmatpush1.msra.mxu0 %v70
    %1175 = vmatprep.subr.mxu0 %v69
    %1176 = vmatpush1.msra.mxu0 %v68
    %1177 = vmatprep.subr.mxu0 %v67
    %1178 = vmatpush1.msra.mxu0 %v66
    %1179 = vmatprep.subr.mxu0 0.0
    %1180 = vmatpush2.msra.mxu0 0.0
    %1181 = vmatprep.subr.mxu0 0.0
    %1182 = vmatpush2.msra.mxu0 0.0
    %1183 = vmatprep.subr.mxu0 0.0
    %1184 = vmatpush2.msra.mxu0 0.0
    %1185 = vmatprep.subr.mxu0 0.0
    %1186 = vmatpush2.msra.mxu0 0.0
    %1187 = vmatprep.subr.mxu0 0.0
    %1188 = vmatpush2.msra.mxu0 0.0
    %1189 = vmatprep.subr.mxu0 0.0
    %1190 = vmatpush2.msra.mxu0 0.0
    %1191 = vmatprep.subr.mxu0 0.0
    %1192 = vmatpush2.msra.mxu0 0.0
    %1193 = vmatprep.subr.mxu0 0.0
    %1194 = vmatpush2.msra.mxu0 0.0
    %1195 = vmatprep.subr.mxu0 0.0
    %1196 = vmatpush2.msra.mxu0 0.0
    %1197 = vmatprep.subr.mxu0 0.0
    %1198 = vmatpush2.msra.mxu0 0.0
    %1199 = vmatprep.subr.mxu0 0.0
    %1200 = vmatpush2.msra.mxu0 0.0
    %1201 = vmatprep.subr.mxu0 0.0
    %1202 = vmatpush2.msra.mxu0 0.0
    %1203 = vmatprep.subr.mxu0 0.0
    %1204 = vmatpush2.msra.mxu0 0.0
    %1205 = vmatprep.subr.mxu0 0.0
    %1206 = vmatpush2.msra.mxu0 0.0
    %1207 = vmatprep.subr.mxu0 0.0
    %1208 = vmatpush2.msra.mxu0 0.0
    %1209 = vmatprep.subr.mxu0 0.0
    %1210 = vmatpush2.msra.mxu0 0.0
    %1211 = vmatprep.mubr.f32.mxu0 0.0
    %1212 = vmatmul.mubr.f32.gmra.mxu0 %v1145
    %v1213 = vpop.f32.mrf.mxu0
    %v1214 = vadd.f32 0.0, %v1213
    %v1215 = vpop.f32.mrf.mxu0
    %v1216 = vadd.f32 0.0, %v1215
    %1217 = vdwg.mxu0
    %s1218 = scalar_lea.vmem [#allocation3], 40
    %v1219 = vld [vmem:[%s1218] sm:$0xff]
    %v1220 = vadd.f32 %v1219, %v1214
    %v1221 = vxor.u32 %v1220, 2147483648
    %v1222 = vmul.f32 %v1221, 1.442695
    %v1223 = vpow.pop %v1222
    %v1224 = vadd.f32 %v1223, 1.0
    %v1225 = vrcp.pop %v1224
    %v1226 = vmul.f32 1.0, %v1225
    %v1227 = vtanh.pop %v1220
    %v1228 = vsel %vm91, %v1227, %v1226
    %v1229 = vmul.f32 %v1228, %v1030
    %1231 = vrot.lane.b32.xlu0 %v1228, 64
    %v1232 = vpop.permute.xlu0 %1231
    %v1234 = vmul.f32 %v1228, %v1232
    %1236 = vrot.lane.b32.xlu0 %v1234, 32
    %v1237 = vpop.permute.xlu0 %1236
    %v1239 = vadd.f32 %v1229, %v1237
    %v1240 = vtanh.pop %v1239
    %1242 = vrot.lane.b32.xlu0 %v1240, 64
    %v1243 = vpop.permute.xlu0 %1242
    %v1245 = vmul.f32 %v1228, %v1243
    %1247 = vrot.lane.b32.xlu0 %v1245, 32
    %v1248 = vpop.permute.xlu0 %1247
    %v1249 = vsel %vm197, %v1248, 0
    %1251 = vmatprep.subr.mxu0 0.0
    %1252 = vmatpush1.msra.mxu0 0.0
    %1253 = vmatprep.subr.mxu0 0.0
    %1254 = vmatpush1.msra.mxu0 0.0
    %1255 = vmatprep.subr.mxu0 0.0
    %1256 = vmatpush1.msra.mxu0 0.0
    %1257 = vmatprep.subr.mxu0 0.0
    %1258 = vmatpush1.msra.mxu0 0.0
    %1259 = vmatprep.subr.mxu0 0.0
    %1260 = vmatpush1.msra.mxu0 0.0
    %1261 = vmatprep.subr.mxu0 0.0
    %1262 = vmatpush1.msra.mxu0 0.0
    %1263 = vmatprep.subr.mxu0 0.0
    %1264 = vmatpush1.msra.mxu0 0.0
    %1265 = vmatprep.subr.mxu0 0.0
    %1266 = vmatpush1.msra.mxu0 0.0
    %1267 = vmatprep.subr.mxu0 0.0
    %1268 = vmatpush1.msra.mxu0 0.0
    %1269 = vmatprep.subr.mxu0 0.0
    %1270 = vmatpush1.msra.mxu0 0.0
    %1271 = vmatprep.subr.mxu0 0.0
    %1272 = vmatpush1.msra.mxu0 0.0
    %1273 = vmatprep.subr.mxu0 0.0
    %1274 = vmatpush1.msra.mxu0 0.0
    %1275 = vmatprep.subr.mxu0 0.0
    %1276 = vmatpush1.msra.mxu0 %v85
    %1277 = vmatprep.subr.mxu0 0.0
    %1278 = vmatpush1.msra.mxu0 %v84
    %1279 = vmatprep.subr.mxu0 0.0
    %1280 = vmatpush1.msra.mxu0 %v83
    %1281 = vmatprep.subr.mxu0 0.0
    %1282 = vmatpush1.msra.mxu0 %v82
    %1283 = vmatprep.subr.mxu0 0.0
    %1284 = vmatpush2.msra.mxu0 0.0
    %1285 = vmatprep.subr.mxu0 0.0
    %1286 = vmatpush2.msra.mxu0 0.0
    %1287 = vmatprep.subr.mxu0 0.0
    %1288 = vmatpush2.msra.mxu0 0.0
    %1289 = vmatprep.subr.mxu0 0.0
    %1290 = vmatpush2.msra.mxu0 0.0
    %1291 = vmatprep.subr.mxu0 0.0
    %1292 = vmatpush2.msra.mxu0 0.0
    %1293 = vmatprep.subr.mxu0 0.0
    %1294 = vmatpush2.msra.mxu0 0.0
    %1295 = vmatprep.subr.mxu0 0.0
    %1296 = vmatpush2.msra.mxu0 0.0
    %1297 = vmatprep.subr.mxu0 0.0
    %1298 = vmatpush2.msra.mxu0 0.0
    %1299 = vmatprep.subr.mxu0 0.0
    %1300 = vmatpush2.msra.mxu0 0.0
    %1301 = vmatprep.subr.mxu0 0.0
    %1302 = vmatpush2.msra.mxu0 0.0
    %1303 = vmatprep.subr.mxu0 0.0
    %1304 = vmatpush2.msra.mxu0 0.0
    %1305 = vmatprep.subr.mxu0 0.0
    %1306 = vmatpush2.msra.mxu0 0.0
    %1307 = vmatprep.subr.mxu0 0.0
    %1308 = vmatpush2.msra.mxu0 0.0
    %1309 = vmatprep.subr.mxu0 0.0
    %1310 = vmatpush2.msra.mxu0 0.0
    %1311 = vmatprep.subr.mxu0 0.0
    %1312 = vmatpush2.msra.mxu0 0.0
    %1313 = vmatprep.subr.mxu0 0.0
    %1314 = vmatpush2.msra.mxu0 0.0
    %1315 = vmatprep.mubr.f32.mxu0 0.0
    %1316 = vmatmul.mubr.f32.gmra.mxu0 %v1249
    %v1317 = vpop.f32.mrf.mxu0
    %v1318 = vadd.f32 %v1216, %v1317
    %v1319 = vpop.f32.mrf.mxu0
    %1320 = vdwg.mxu0
    %v1321 = vadd.f32 %v1318, %v274
    %v1322 = vxor.u32 %v1321, 2147483648
    %v1323 = vmul.f32 %v1322, 1.442695
    %v1324 = vpow.pop %v1323
    %v1325 = vadd.f32 %v1324, 1.0
    %v1326 = vrcp.pop %v1325
    %v1327 = vmul.f32 1.0, %v1326
    %v1328 = vtanh.pop %v1321
    %v1329 = vsel %vm91, %v1328, %v1327
    %v1330 = vmul.f32 %v1329, %v1131
    %1332 = vrot.lane.b32.xlu0 %v1329, 64
    %v1333 = vpop.permute.xlu0 %1332
    %v1335 = vmul.f32 %v1329, %v1333
    %1337 = vrot.lane.b32.xlu0 %v1335, 32
    %v1338 = vpop.permute.xlu0 %1337
    %v1340 = vadd.f32 %v1330, %v1338
    %v1341 = vtanh.pop %v1340
    %1343 = vrot.lane.b32.xlu0 %v1341, 64
    %v1344 = vpop.permute.xlu0 %1343
    %v1346 = vmul.f32 %v1329, %v1344
    %1349 = vrot.lane.b32.xlu0 %v1346, 64
    %v1350 = vpop.permute.xlu0 %1349
    %v1352 = vsel %vm197, %v1248, %v1350
    %v1354 = vsel %vm92, %v1352, 0
    %1356 = vmatprep.subr.mxu0 0.0
    %1357 = vmatpush1.msra.mxu0 0.0
    %1358 = vmatprep.subr.mxu0 0.0
    %1359 = vmatpush1.msra.mxu0 0.0
    %1360 = vmatprep.subr.mxu0 0.0
    %1361 = vmatpush1.msra.mxu0 0.0
    %1362 = vmatprep.subr.mxu0 0.0
    %1363 = vmatpush1.msra.mxu0 0.0
    %1364 = vmatprep.subr.mxu0 0.0
    %1365 = vmatpush1.msra.mxu0 0.0
    %1366 = vmatprep.subr.mxu0 0.0
    %1367 = vmatpush1.msra.mxu0 0.0
    %1368 = vmatprep.subr.mxu0 0.0
    %1369 = vmatpush1.msra.mxu0 0.0
    %1370 = vmatprep.subr.mxu0 0.0
    %1371 = vmatpush1.msra.mxu0 0.0
    %1372 = vmatprep.subr.mxu0 %v81
    %1373 = vmatpush1.msra.mxu0 %v80
    %1374 = vmatprep.subr.mxu0 %v79
    %1375 = vmatpush1.msra.mxu0 %v78
    %1376 = vmatprep.subr.mxu0 %v77
    %1377 = vmatpush1.msra.mxu0 %v76
    %1378 = vmatprep.subr.mxu0 %v75
    %1379 = vmatpush1.msra.mxu0 %v74
    %1380 = vmatprep.subr.mxu0 %v73
    %1381 = vmatpush1.msra.mxu0 %v72
    %1382 = vmatprep.subr.mxu0 %v71
    %1383 = vmatpush1.msra.mxu0 %v70
    %1384 = vmatprep.subr.mxu0 %v69
    %1385 = vmatpush1.msra.mxu0 %v68
    %1386 = vmatprep.subr.mxu0 %v67
    %1387 = vmatpush1.msra.mxu0 %v66
    %1388 = vmatprep.subr.mxu0 0.0
    %1389 = vmatpush2.msra.mxu0 0.0
    %1390 = vmatprep.subr.mxu0 0.0
    %1391 = vmatpush2.msra.mxu0 0.0
    %1392 = vmatprep.subr.mxu0 0.0
    %1393 = vmatpush2.msra.mxu0 0.0
    %1394 = vmatprep.subr.mxu0 0.0
    %1395 = vmatpush2.msra.mxu0 0.0
    %1396 = vmatprep.subr.mxu0 0.0
    %1397 = vmatpush2.msra.mxu0 0.0
    %1398 = vmatprep.subr.mxu0 0.0
    %1399 = vmatpush2.msra.mxu0 0.0
    %1400 = vmatprep.subr.mxu0 0.0
    %1401 = vmatpush2.msra.mxu0 0.0
    %1402 = vmatprep.subr.mxu0 0.0
    %1403 = vmatpush2.msra.mxu0 0.0
    %1404 = vmatprep.subr.mxu0 0.0
    %1405 = vmatpush2.msra.mxu0 0.0
    %1406 = vmatprep.subr.mxu0 0.0
    %1407 = vmatpush2.msra.mxu0 0.0
    %1408 = vmatprep.subr.mxu0 0.0
    %1409 = vmatpush2.msra.mxu0 0.0
    %1410 = vmatprep.subr.mxu0 0.0
    %1411 = vmatpush2.msra.mxu0 0.0
    %1412 = vmatprep.subr.mxu0 0.0
    %1413 = vmatpush2.msra.mxu0 0.0
    %1414 = vmatprep.subr.mxu0 0.0
    %1415 = vmatpush2.msra.mxu0 0.0
    %1416 = vmatprep.subr.mxu0 0.0
    %1417 = vmatpush2.msra.mxu0 0.0
    %1418 = vmatprep.subr.mxu0 0.0
    %1419 = vmatpush2.msra.mxu0 0.0
    %1420 = vmatprep.mubr.f32.mxu0 0.0
    %1421 = vmatmul.mubr.f32.gmra.mxu0 %v1354
    %v1422 = vpop.f32.mrf.mxu0
    %v1423 = vadd.f32 0.0, %v1422
    %v1424 = vpop.f32.mrf.mxu0
    %v1425 = vadd.f32 0.0, %v1424
    %1426 = vdwg.mxu0
    %s1427 = scalar_lea.vmem [#allocation3], 48
    %v1428 = vld [vmem:[%s1427] sm:$0xff]
    %v1429 = vadd.f32 %v1428, %v1423
    %v1430 = vxor.u32 %v1429, 2147483648
    %v1431 = vmul.f32 %v1430, 1.442695
    %v1432 = vpow.pop %v1431
    %v1433 = vadd.f32 %v1432, 1.0
    %v1434 = vrcp.pop %v1433
    %v1435 = vmul.f32 1.0, %v1434
    %v1436 = vtanh.pop %v1429
    %v1437 = vsel %vm91, %v1436, %v1435
    %v1438 = vmul.f32 %v1437, %v1239
    %1440 = vrot.lane.b32.xlu0 %v1437, 64
    %v1441 = vpop.permute.xlu0 %1440
    %v1443 = vmul.f32 %v1437, %v1441
    %1445 = vrot.lane.b32.xlu0 %v1443, 32
    %v1446 = vpop.permute.xlu0 %1445
    %v1448 = vadd.f32 %v1438, %v1446
    %v1449 = vtanh.pop %v1448
    %1451 = vrot.lane.b32.xlu0 %v1449, 64
    %v1452 = vpop.permute.xlu0 %1451
    %v1454 = vmul.f32 %v1437, %v1452
    %1456 = vrot.lane.b32.xlu0 %v1454, 32
    %v1457 = vpop.permute.xlu0 %1456
    %v1458 = vsel %vm197, %v1457, 0
    %1460 = vmatprep.subr.mxu0 0.0
    %1461 = vmatpush1.msra.mxu0 0.0
    %1462 = vmatprep.subr.mxu0 0.0
    %1463 = vmatpush1.msra.mxu0 0.0
    %1464 = vmatprep.subr.mxu0 0.0
    %1465 = vmatpush1.msra.mxu0 0.0
    %1466 = vmatprep.subr.mxu0 0.0
    %1467 = vmatpush1.msra.mxu0 0.0
    %1468 = vmatprep.subr.mxu0 0.0
    %1469 = vmatpush1.msra.mxu0 0.0
    %1470 = vmatprep.subr.mxu0 0.0
    %1471 = vmatpush1.msra.mxu0 0.0
    %1472 = vmatprep.subr.mxu0 0.0
    %1473 = vmatpush1.msra.mxu0 0.0
    %1474 = vmatprep.subr.mxu0 0.0
    %1475 = vmatpush1.msra.mxu0 0.0
    %1476 = vmatprep.subr.mxu0 0.0
    %1477 = vmatpush1.msra.mxu0 0.0
    %1478 = vmatprep.subr.mxu0 0.0
    %1479 = vmatpush1.msra.mxu0 0.0
    %1480 = vmatprep.subr.mxu0 0.0
    %1481 = vmatpush1.msra.mxu0 0.0
    %1482 = vmatprep.subr.mxu0 0.0
    %1483 = vmatpush1.msra.mxu0 0.0
    %1484 = vmatprep.subr.mxu0 0.0
    %1485 = vmatpush1.msra.mxu0 %v85
    %1486 = vmatprep.subr.mxu0 0.0
    %1487 = vmatpush1.msra.mxu0 %v84
    %1488 = vmatprep.subr.mxu0 0.0
    %1489 = vmatpush1.msra.mxu0 %v83
    %1490 = vmatprep.subr.mxu0 0.0
    %1491 = vmatpush1.msra.mxu0 %v82
    %1492 = vmatprep.subr.mxu0 0.0
    %1493 = vmatpush2.msra.mxu0 0.0
    %1494 = vmatprep.subr.mxu0 0.0
    %1495 = vmatpush2.msra.mxu0 0.0
    %1496 = vmatprep.subr.mxu0 0.0
    %1497 = vmatpush2.msra.mxu0 0.0
    %1498 = vmatprep.subr.mxu0 0.0
    %1499 = vmatpush2.msra.mxu0 0.0
    %1500 = vmatprep.subr.mxu0 0.0
    %1501 = vmatpush2.msra.mxu0 0.0
    %1502 = vmatprep.subr.mxu0 0.0
    %1503 = vmatpush2.msra.mxu0 0.0
    %1504 = vmatprep.subr.mxu0 0.0
    %1505 = vmatpush2.msra.mxu0 0.0
    %1506 = vmatprep.subr.mxu0 0.0
    %1507 = vmatpush2.msra.mxu0 0.0
    %1508 = vmatprep.subr.mxu0 0.0
    %1509 = vmatpush2.msra.mxu0 0.0
    %1510 = vmatprep.subr.mxu0 0.0
    %1511 = vmatpush2.msra.mxu0 0.0
    %1512 = vmatprep.subr.mxu0 0.0
    %1513 = vmatpush2.msra.mxu0 0.0
    %1514 = vmatprep.subr.mxu0 0.0
    %1515 = vmatpush2.msra.mxu0 0.0
    %1516 = vmatprep.subr.mxu0 0.0
    %1517 = vmatpush2.msra.mxu0 0.0
    %1518 = vmatprep.subr.mxu0 0.0
    %1519 = vmatpush2.msra.mxu0 0.0
    %1520 = vmatprep.subr.mxu0 0.0
    %1521 = vmatpush2.msra.mxu0 0.0
    %1522 = vmatprep.subr.mxu0 0.0
    %1523 = vmatpush2.msra.mxu0 0.0
    %1524 = vmatprep.mubr.f32.mxu0 0.0
    %1525 = vmatmul.mubr.f32.gmra.mxu0 %v1458
    %v1526 = vpop.f32.mrf.mxu0
    %v1527 = vadd.f32 %v1425, %v1526
    %v1528 = vpop.f32.mrf.mxu0
    %1529 = vdwg.mxu0
    %v1530 = vadd.f32 %v1527, %v274
    %v1531 = vxor.u32 %v1530, 2147483648
    %v1532 = vmul.f32 %v1531, 1.442695
    %v1533 = vpow.pop %v1532
    %v1534 = vadd.f32 %v1533, 1.0
    %v1535 = vrcp.pop %v1534
    %v1536 = vmul.f32 1.0, %v1535
    %v1537 = vtanh.pop %v1530
    %v1538 = vsel %vm91, %v1537, %v1536
    %v1539 = vmul.f32 %v1538, %v1340
    %1541 = vrot.lane.b32.xlu0 %v1538, 64
    %v1542 = vpop.permute.xlu0 %1541
    %v1544 = vmul.f32 %v1538, %v1542
    %1546 = vrot.lane.b32.xlu0 %v1544, 32
    %v1547 = vpop.permute.xlu0 %1546
    %v1549 = vadd.f32 %v1539, %v1547
    %v1550 = vtanh.pop %v1549
    %1552 = vrot.lane.b32.xlu0 %v1550, 64
    %v1553 = vpop.permute.xlu0 %1552
    %v1555 = vmul.f32 %v1538, %v1553
    %1558 = vrot.lane.b32.xlu0 %v1555, 64
    %v1559 = vpop.permute.xlu0 %1558
    %v1561 = vsel %vm197, %v1457, %v1559
    %v1563 = vsel %vm92, %v1561, 0
    %1565 = vmatprep.subr.mxu0 0.0
    %1566 = vmatpush1.msra.mxu0 0.0
    %1567 = vmatprep.subr.mxu0 0.0
    %1568 = vmatpush1.msra.mxu0 0.0
    %1569 = vmatprep.subr.mxu0 0.0
    %1570 = vmatpush1.msra.mxu0 0.0
    %1571 = vmatprep.subr.mxu0 0.0
    %1572 = vmatpush1.msra.mxu0 0.0
    %1573 = vmatprep.subr.mxu0 0.0
    %1574 = vmatpush1.msra.mxu0 0.0
    %1575 = vmatprep.subr.mxu0 0.0
    %1576 = vmatpush1.msra.mxu0 0.0
    %1577 = vmatprep.subr.mxu0 0.0
    %1578 = vmatpush1.msra.mxu0 0.0
    %1579 = vmatprep.subr.mxu0 0.0
    %1580 = vmatpush1.msra.mxu0 0.0
    %1581 = vmatprep.subr.mxu0 %v81
    %1582 = vmatpush1.msra.mxu0 %v80
    %1583 = vmatprep.subr.mxu0 %v79
    %1584 = vmatpush1.msra.mxu0 %v78
    %1585 = vmatprep.subr.mxu0 %v77
    %1586 = vmatpush1.msra.mxu0 %v76
    %1587 = vmatprep.subr.mxu0 %v75
    %1588 = vmatpush1.msra.mxu0 %v74
    %1589 = vmatprep.subr.mxu0 %v73
    %1590 = vmatpush1.msra.mxu0 %v72
    %1591 = vmatprep.subr.mxu0 %v71
    %1592 = vmatpush1.msra.mxu0 %v70
    %1593 = vmatprep.subr.mxu0 %v69
    %1594 = vmatpush1.msra.mxu0 %v68
    %1595 = vmatprep.subr.mxu0 %v67
    %1596 = vmatpush1.msra.mxu0 %v66
    %1597 = vmatprep.subr.mxu0 0.0
    %1598 = vmatpush2.msra.mxu0 0.0
    %1599 = vmatprep.subr.mxu0 0.0
    %1600 = vmatpush2.msra.mxu0 0.0
    %1601 = vmatprep.subr.mxu0 0.0
    %1602 = vmatpush2.msra.mxu0 0.0
    %1603 = vmatprep.subr.mxu0 0.0
    %1604 = vmatpush2.msra.mxu0 0.0
    %1605 = vmatprep.subr.mxu0 0.0
    %1606 = vmatpush2.msra.mxu0 0.0
    %1607 = vmatprep.subr.mxu0 0.0
    %1608 = vmatpush2.msra.mxu0 0.0
    %1609 = vmatprep.subr.mxu0 0.0
    %1610 = vmatpush2.msra.mxu0 0.0
    %1611 = vmatprep.subr.mxu0 0.0
    %1612 = vmatpush2.msra.mxu0 0.0
    %1613 = vmatprep.subr.mxu0 0.0
    %1614 = vmatpush2.msra.mxu0 0.0
    %1615 = vmatprep.subr.mxu0 0.0
    %1616 = vmatpush2.msra.mxu0 0.0
    %1617 = vmatprep.subr.mxu0 0.0
    %1618 = vmatpush2.msra.mxu0 0.0
    %1619 = vmatprep.subr.mxu0 0.0
    %1620 = vmatpush2.msra.mxu0 0.0
    %1621 = vmatprep.subr.mxu0 0.0
    %1622 = vmatpush2.msra.mxu0 0.0
    %1623 = vmatprep.subr.mxu0 0.0
    %1624 = vmatpush2.msra.mxu0 0.0
    %1625 = vmatprep.subr.mxu0 0.0
    %1626 = vmatpush2.msra.mxu0 0.0
    %1627 = vmatprep.subr.mxu0 0.0
    %1628 = vmatpush2.msra.mxu0 0.0
    %1629 = vmatprep.mubr.f32.mxu0 0.0
    %1630 = vmatmul.mubr.f32.gmra.mxu0 %v1563
    %v1631 = vpop.f32.mrf.mxu0
    %v1632 = vadd.f32 0.0, %v1631
    %v1633 = vpop.f32.mrf.mxu0
    %v1634 = vadd.f32 0.0, %v1633
    %1635 = vdwg.mxu0
    %s1636 = scalar_lea.vmem [#allocation3], 56
    %v1637 = vld [vmem:[%s1636] sm:$0xff]
    %v1638 = vadd.f32 %v1637, %v1632
    %v1639 = vxor.u32 %v1638, 2147483648
    %v1640 = vmul.f32 %v1639, 1.442695
    %v1641 = vpow.pop %v1640
    %v1642 = vadd.f32 %v1641, 1.0
    %v1643 = vrcp.pop %v1642
    %v1644 = vmul.f32 1.0, %v1643
    %v1645 = vtanh.pop %v1638
    %v1646 = vsel %vm91, %v1645, %v1644
    %v1647 = vmul.f32 %v1646, %v1448
    %1649 = vrot.lane.b32.xlu0 %v1646, 64
    %v1650 = vpop.permute.xlu0 %1649
    %v1652 = vmul.f32 %v1646, %v1650
    %1654 = vrot.lane.b32.xlu0 %v1652, 32
    %v1655 = vpop.permute.xlu0 %1654
    %v1657 = vadd.f32 %v1647, %v1655
    %v1658 = vtanh.pop %v1657
    %1660 = vrot.lane.b32.xlu0 %v1658, 64
    %v1661 = vpop.permute.xlu0 %1660
    %v1663 = vmul.f32 %v1646, %v1661
    %1665 = vrot.lane.b32.xlu0 %v1663, 32
    %v1666 = vpop.permute.xlu0 %1665
    %v1667 = vsel %vm197, %v1666, 0
    %1669 = vmatprep.subr.mxu0 0.0
    %1670 = vmatpush1.msra.mxu0 0.0
    %1671 = vmatprep.subr.mxu0 0.0
    %1672 = vmatpush1.msra.mxu0 0.0
    %1673 = vmatprep.subr.mxu0 0.0
    %1674 = vmatpush1.msra.mxu0 0.0
    %1675 = vmatprep.subr.mxu0 0.0
    %1676 = vmatpush1.msra.mxu0 0.0
    %1677 = vmatprep.subr.mxu0 0.0
    %1678 = vmatpush1.msra.mxu0 0.0
    %1679 = vmatprep.subr.mxu0 0.0
    %1680 = vmatpush1.msra.mxu0 0.0
    %1681 = vmatprep.subr.mxu0 0.0
    %1682 = vmatpush1.msra.mxu0 0.0
    %1683 = vmatprep.subr.mxu0 0.0
    %1684 = vmatpush1.msra.mxu0 0.0
    %1685 = vmatprep.subr.mxu0 0.0
    %1686 = vmatpush1.msra.mxu0 0.0
    %1687 = vmatprep.subr.mxu0 0.0
    %1688 = vmatpush1.msra.mxu0 0.0
    %1689 = vmatprep.subr.mxu0 0.0
    %1690 = vmatpush1.msra.mxu0 0.0
    %1691 = vmatprep.subr.mxu0 0.0
    %1692 = vmatpush1.msra.mxu0 0.0
    %1693 = vmatprep.subr.mxu0 0.0
    %1694 = vmatpush1.msra.mxu0 %v85
    %1695 = vmatprep.subr.mxu0 0.0
    %1696 = vmatpush1.msra.mxu0 %v84
    %1697 = vmatprep.subr.mxu0 0.0
    %1698 = vmatpush1.msra.mxu0 %v83
    %1699 = vmatprep.subr.mxu0 0.0
    %1700 = vmatpush1.msra.mxu0 %v82
    %1701 = vmatprep.subr.mxu0 0.0
    %1702 = vmatpush2.msra.mxu0 0.0
    %1703 = vmatprep.subr.mxu0 0.0
    %1704 = vmatpush2.msra.mxu0 0.0
    %1705 = vmatprep.subr.mxu0 0.0
    %1706 = vmatpush2.msra.mxu0 0.0
    %1707 = vmatprep.subr.mxu0 0.0
    %1708 = vmatpush2.msra.mxu0 0.0
    %1709 = vmatprep.subr.mxu0 0.0
    %1710 = vmatpush2.msra.mxu0 0.0
    %1711 = vmatprep.subr.mxu0 0.0
    %1712 = vmatpush2.msra.mxu0 0.0
    %1713 = vmatprep.subr.mxu0 0.0
    %1714 = vmatpush2.msra.mxu0 0.0
    %1715 = vmatprep.subr.mxu0 0.0
    %1716 = vmatpush2.msra.mxu0 0.0
    %1717 = vmatprep.subr.mxu0 0.0
    %1718 = vmatpush2.msra.mxu0 0.0
    %1719 = vmatprep.subr.mxu0 0.0
    %1720 = vmatpush2.msra.mxu0 0.0
    %1721 = vmatprep.subr.mxu0 0.0
    %1722 = vmatpush2.msra.mxu0 0.0
    %1723 = vmatprep.subr.mxu0 0.0
    %1724 = vmatpush2.msra.mxu0 0.0
    %1725 = vmatprep.subr.mxu0 0.0
    %1726 = vmatpush2.msra.mxu0 0.0
    %1727 = vmatprep.subr.mxu0 0.0
    %1728 = vmatpush2.msra.mxu0 0.0
    %1729 = vmatprep.subr.mxu0 0.0
    %1730 = vmatpush2.msra.mxu0 0.0
    %1731 = vmatprep.subr.mxu0 0.0
    %1732 = vmatpush2.msra.mxu0 0.0
    %1733 = vmatprep.mubr.f32.mxu0 0.0
    %1734 = vmatmul.mubr.f32.gmra.mxu0 %v1667
    %v1735 = vpop.f32.mrf.mxu0
    %v1736 = vadd.f32 %v1634, %v1735
    %v1737 = vpop.f32.mrf.mxu0
    %1738 = vdwg.mxu0
    %v1739 = vadd.f32 %v1736, %v274
    %v1740 = vxor.u32 %v1739, 2147483648
    %v1741 = vmul.f32 %v1740, 1.442695
    %v1742 = vpow.pop %v1741
    %v1743 = vadd.f32 %v1742, 1.0
    %v1744 = vrcp.pop %v1743
    %v1745 = vmul.f32 1.0, %v1744
    %v1746 = vtanh.pop %v1739
    %v1747 = vsel %vm91, %v1746, %v1745
    %v1748 = vmul.f32 %v1747, %v1549
    %1750 = vrot.lane.b32.xlu0 %v1747, 64
    %v1751 = vpop.permute.xlu0 %1750
    %v1753 = vmul.f32 %v1747, %v1751
    %1755 = vrot.lane.b32.xlu0 %v1753, 32
    %v1756 = vpop.permute.xlu0 %1755
    %v1758 = vadd.f32 %v1748, %v1756
    %v1759 = vtanh.pop %v1758
    %1761 = vrot.lane.b32.xlu0 %v1759, 64
    %v1762 = vpop.permute.xlu0 %1761
    %v1764 = vmul.f32 %v1747, %v1762
    %1767 = vrot.lane.b32.xlu0 %v1764, 64
    %v1768 = vpop.permute.xlu0 %1767
    %v1770 = vsel %vm197, %v1666, %v1768
    %v1771 = vld [vmem:[%s4] sm:$0x1]
    %v1773 = vlaneseq
    %v1774 = vshrl.u32 %v1773, 7
    %v1775 = vsub.s32 0, %v1774
    %v1776 = vrot.slane %v1771, %v1775
    %1777 = vrot.lane.b32.xlu0 %v1776, 32
    %v1778 = vpop.permute.xlu0 %1777
    %v1780 = vmul.f32 %v1770, %v1778
    %1782 = vrot.lane.b32.xlu0 %v1780, 96
    %v1783 = vpop.permute.xlu0 %1782
    %v1785 = vsel %vm197, %v1783, 0.0
    %1786 = vadd.xlane.f32.xlu0 %v1785
    %v1787 = vpop.xlane.xlu0 %1786
    %v1788 = vld [vmem:[#allocation2] sm:$0x1]
    %v1790 = vlaneseq
    %v1791 = vshrl.u32 %v1790, 7
    %v1792 = vsub.s32 0, %v1791
    %v1793 = vrot.slane %v1788, %v1792
    %v1795 = vadd.f32 %v1787, %v1793
    %vm1796 = vcmask 7168
    %1797 = vst.msk [vmem:[%s6] sm:$0xff] %vm1796, %v1795
    // Predicated region
    $region38: #{tpu_custom_call.1} parent=1 // pred_check
      _
    $region39: #{tpu_custom_call.1} parent=1 // pred_check_branch
      %1799 = sbr.rel (0) target = $region41
    $region40: #{tpu_custom_call.1} parent=1 // pred_region
      _
    $region41: #{tpu_custom_call.1} parent=1 // pred_fallthru
      _
    // Predicated region
    $region42: #{tpu_custom_call.1} parent=1 // pred_check
      _
    $region43: #{tpu_custom_call.1} parent=1 // pred_check_branch
      %1801 = sbr.rel (0) target = $region45
    $region44: #{tpu_custom_call.1} parent=1 // pred_region
      _
    $region45: #{tpu_custom_call.1} parent=1 // pred_fallthru
      _
    %1802 = vsyncpa [#allocation4], 1
    %1803 = vsyncpa [#allocation6], 1

</llo_original>
